<compile_context>
chip_gen: v7x
topology: tpu7x:2x2x1
jax: 0.10.0
libtpu: 0.0.40
codegen_flags: <defaults>
</compile_context>

<pallas_src>
import functools
import math

import numpy as np

import jax
import jax.numpy as jnp
from jax.experimental import pallas as pl
from jax.experimental.pallas import tpu as pltpu


# 3x3 tap order (row-major over the kernel window). Shared by the kernel,
# the mask builder and the weight flattener so the im2col K ordering matches.
_TAPS = [(dy, dx) for dy in (-1, 0, 1) for dx in (-1, 0, 1)]


# ---------------------------------------------------------------------------
# Compile-time constants (built with numpy; become XLA constants)
# ---------------------------------------------------------------------------
def _tap_masks(H, W):
    """(9, H*W) f32 {0,1} validity masks for each 3x3 tap (zero padding)."""
    hh, ww = np.meshgrid(np.arange(H), np.arange(W), indexing="ij")
    rows = []
    for dy, dx in _TAPS:
        valid = ((hh + dy >= 0) & (hh + dy < H) &
                 (ww + dx >= 0) & (ww + dx < W))
        rows.append(valid.reshape(-1).astype(np.float32))
    return jnp.asarray(np.stack(rows, axis=0))


def _up1d_matrix(L):
    """(2L, L) matrix of F.interpolate(scale=2, linear, align_corners=False)."""
    U = np.zeros((2 * L, L), np.float32)
    for i in range(L):
        U[2 * i, max(i - 1, 0)] += 0.25
        U[2 * i, i] += 0.75
        U[2 * i + 1, i] += 0.75
        U[2 * i + 1, min(i + 1, L - 1)] += 0.25
    return U


def _upsample_matrix(Hh, Wh):
    """(Hh*Wh, 4*Hh*Wh): pm_flat @ M == flattened bilinear 2x upsample."""
    M = np.kron(_up1d_matrix(Hh), _up1d_matrix(Wh))   # (H*W, Hh*Wh)
    return jnp.asarray(M.T)


def _flatten_conv_weight(w_hwio, cin_pad=None):
    """(3,3,Cin,Cout) HWIO -> (Cout, 9*Cin_pad), rows ordered (tap, channel)."""
    kh, kw, cin, cout = w_hwio.shape
    if cin_pad is not None and cin_pad > cin:
        w_hwio = jnp.pad(w_hwio, ((0, 0), (0, 0), (0, cin_pad - cin), (0, 0)))
        cin = cin_pad
    return w_hwio.reshape(kh * kw * cin, cout).T


# ---------------------------------------------------------------------------
# Fused kernel: s = convFS(f)+convMem(mem); s = ResFS(s);
#               m = s + up2x(pm);           m = ResMM(m)
# ---------------------------------------------------------------------------
def _refine_kernel(x_ref, pm_ref, masks_ref, up_ref,
                   wf_ref, bf_ref,
                   wa1_ref, ba1_ref, wa2_ref, ba2_ref,
                   wb1_ref, bb1_ref, wb2_ref, bb2_ref,
                   out_ref, patch_scr, *, H, W, c_front, c_res):
    HW = H * W
    masks = masks_ref[...]                                 # (9, HW) f32 {0,1}

    def conv3x3(a, c, w_ref, b_ref):
        """3x3 'same' conv as a single im2col matmul.

        a: (c, HW) activation; w_ref: (Cout, 9*c); b_ref: (Cout, 1).
        Taps are realized with lane rolls + edge masks; stores into the
        patch scratch are sublane-aligned (c is a multiple of 8).
        """
        for t, (dy, dx) in enumerate(_TAPS):
            d = dy * W + dx
            if d == 0:
                tap = a                                    # centre tap: mask==1
            else:
                tap = pltpu.roll(a, (-d) % HW, axis=1) * masks[t:t + 1, :]
            patch_scr[t * c:(t + 1) * c, :] = tap
        patches = patch_scr[0:9 * c, :]                    # (9c, HW)
        return (jnp.dot(w_ref[...], patches,
                        preferred_element_type=jnp.float32) + b_ref[...])

    # s = convFS(f) + convMemory(mem)  (single conv on concatenated channels)
    s = conv3x3(x_ref[0], c_front, wf_ref, bf_ref)

    # s = ResFS(s):  r = conv2(relu(conv1(relu(s))));  s = s + r
    r = conv3x3(jnp.maximum(s, 0.0), c_res, wa1_ref, ba1_ref)
    r = conv3x3(jnp.maximum(r, 0.0), c_res, wa2_ref, ba2_ref)
    s = s + r

    # m = s + bilinear_upsample_2x(pm)   (constant-matrix MXU matmul)
    m = s + jnp.dot(pm_ref[0], up_ref[...], preferred_element_type=jnp.float32)

    # m = ResMM(m)
    r = conv3x3(jnp.maximum(m, 0.0), c_res, wb1_ref, bb1_ref)
    r = conv3x3(jnp.maximum(r, 0.0), c_res, wb2_ref, bb2_ref)
    out_ref[0] = (m + r).astype(out_ref.dtype)


# ---------------------------------------------------------------------------
# Forward wrapper (NCHW in / NCHW out, like the PyTorch module)
# ---------------------------------------------------------------------------
@functools.partial(jax.jit, static_argnums=(4,))
def refine_forward(params, f, pm, mem, scale_factor=2):
    assert scale_factor == 2, "this implementation fixes scale_factor=2"
    N, Cf, H, W = f.shape
    Cm = mem.shape[1]
    P = params["w_fs"].shape[-1]
    Hh, Wh = pm.shape[2], pm.shape[3]
    assert (2 * Hh, 2 * Wh) == (H, W)
    HW, HWq = H * W, Hh * Wh

    # Fuse convFS/convMemory inputs by channel concat; pad channels to a
    # multiple of 8 so every in-kernel sublane slice is aligned. Spatial dims
    # are flattened so the lane axis is H*W (lane-dense stores/VPU ops).
    c_cat = Cf + Cm
    c_front = ((c_cat + 7) // 8) * 8
    x = jnp.concatenate([f.reshape(N, Cf, HW), mem.reshape(N, Cm, HW)], axis=1)
    if c_front > c_cat:
        x = jnp.pad(x, ((0, 0), (0, c_front - c_cat), (0, 0)))
    pm_flat = pm.reshape(N, P, HWq)

    # Compile-time constants.
    masks = _tap_masks(H, W)              # (9, HW)
    up_mat = _upsample_matrix(Hh, Wh)     # (HWq, HW)

    # Weights flattened to (Cout, 9*Cin), matching the in-kernel tap order.
    w_front = _flatten_conv_weight(
        jnp.concatenate([params["w_fs"], params["w_mem"]], axis=2), c_front)
    wa1 = _flatten_conv_weight(params["w_fs1"])
    wa2 = _flatten_conv_weight(params["w_fs2"])
    wb1 = _flatten_conv_weight(params["w_mm1"])
    wb2 = _flatten_conv_weight(params["w_mm2"])

    kernel = functools.partial(_refine_kernel, H=H, W=W,
                               c_front=c_front, c_res=P)

    def const2(shape):
        return pl.BlockSpec(shape, lambda b: (0, 0))

    out_flat = pl.pallas_call(
        kernel,
        out_shape=jax.ShapeDtypeStruct((N, P, HW), f.dtype),
        grid=(N,),
        in_specs=[
            pl.BlockSpec((1, c_front, HW), lambda b: (b, 0, 0)),   # x (f|mem)
            pl.BlockSpec((1, P, HWq), lambda b: (b, 0, 0)),        # pm (low-res)
            const2((9, HW)),                                       # tap masks
            const2((HWq, HW)),                                     # upsample mat
            const2((P, 9 * c_front)), const2((P, 1)),              # front conv
            const2((P, 9 * P)), const2((P, 1)),                    # ResFS conv1
            const2((P, 9 * P)), const2((P, 1)),                    # ResFS conv2
            const2((P, 9 * P)), const2((P, 1)),                    # ResMM conv1
            const2((P, 9 * P)), const2((P, 1)),                    # ResMM conv2
        ],
        out_specs=pl.BlockSpec((1, P, HW), lambda b: (b, 0, 0)),
        scratch_shapes=[pltpu.VMEM((9 * max(c_front, P), HW), jnp.float32)],
        compiler_params=pltpu.CompilerParams(
            dimension_semantics=("parallel",)),
    )(x, pm_flat, masks, up_mat,
      w_front, params["b_fs"],
      wa1, params["b_fs1"], wa2, params["b_fs2"],
      wb1, params["b_mm1"], wb2, params["b_mm2"])

    return out_flat.reshape(N, P, H, W)


# ---------------------------------------------------------------------------
# Parameter init (deterministic synthetic; mirrors nn.Conv2d default shapes)
# ---------------------------------------------------------------------------
def _conv_init(key, cin, cout, with_bias=True):
    kw, kb = jax.random.split(key)
    bound = 1.0 / math.sqrt(cin * 9)
    w = jax.random.uniform(kw, (3, 3, cin, cout), jnp.float32, -bound, bound)
    b = (jax.random.uniform(kb, (cout, 1), jnp.float32, -bound, bound)
         if with_bias else None)
    return w, b


def init_refine_params(key, inplanes, planes):
    ks = jax.random.split(key, 6)
    w_fs, b_fs = _conv_init(ks[0], inplanes, planes)
    w_mem, _ = _conv_init(ks[1], inplanes // 2, planes, with_bias=False)
    w_fs1, b_fs1 = _conv_init(ks[2], planes, planes)   # ResFS (no downsample)
    w_fs2, b_fs2 = _conv_init(ks[3], planes, planes)
    w_mm1, b_mm1 = _conv_init(ks[4], planes, planes)   # ResMM
    w_mm2, b_mm2 = _conv_init(ks[5], planes, planes)
    return dict(w_fs=w_fs, b_fs=b_fs, w_mem=w_mem,
                w_fs1=w_fs1, b_fs1=b_fs1, w_fs2=w_fs2, b_fs2=b_fs2,
                w_mm1=w_mm1, b_mm1=b_mm1, w_mm2=w_mm2, b_mm2=b_mm2)


if __name__ == "__main__":
    key = jax.random.PRNGKey(0)
    k_param, k_f, k_pm, k_mem = jax.random.split(key, 4)

    N, inplanes, planes, H, W, sf = 2, 8, 8, 16, 16, 2
    params = init_refine_params(k_param, inplanes, planes)

    f = jax.random.normal(k_f, (N, inplanes, H, W), jnp.float32)
    pm = jax.random.normal(k_pm, (N, planes, H // sf, W // sf), jnp.float32)
    mem = jax.random.normal(k_mem, (N, inplanes // 2, H, W), jnp.float32)

    out = refine_forward(params, f, pm, mem, sf)
    jax.block_until_ready(out)
    assert out.shape == (N, planes, H, W), out.shape
    assert bool(jnp.all(jnp.isfinite(out)))
    print("KERNEL_OK")
</pallas_src>

<mosaic_0001>
module attributes {stable_mosaic.version = 11 : i64} {
  func.func @_refine_kernel(%arg0: i32, %arg1: memref<1x16x256xf32, #tpu.memory_space<vmem>>, %arg2: memref<1x8x64xf32, #tpu.memory_space<vmem>>, %arg3: memref<9x256xf32, #tpu.memory_space<vmem>>, %arg4: memref<64x256xf32, #tpu.memory_space<vmem>>, %arg5: memref<8x144xf32, #tpu.memory_space<vmem>>, %arg6: memref<8x1xf32, #tpu.memory_space<vmem>>, %arg7: memref<8x72xf32, #tpu.memory_space<vmem>>, %arg8: memref<8x1xf32, #tpu.memory_space<vmem>>, %arg9: memref<8x72xf32, #tpu.memory_space<vmem>>, %arg10: memref<8x1xf32, #tpu.memory_space<vmem>>, %arg11: memref<8x72xf32, #tpu.memory_space<vmem>>, %arg12: memref<8x1xf32, #tpu.memory_space<vmem>>, %arg13: memref<8x72xf32, #tpu.memory_space<vmem>>, %arg14: memref<8x1xf32, #tpu.memory_space<vmem>>, %arg15: memref<1x8x256xf32, #tpu.memory_space<vmem>>, %arg16: memref<144x256xf32, #tpu.memory_space<vmem>>) attributes {dimension_semantics = [#tpu.dimension_semantics<parallel>], iteration_bounds = array<i64: 2>, scalar_prefetch = 0 : i64, scratch_operands = 1 : i64, tpu.core_type = #tpu.core_type<tc>, window_params = [{transform_indices = @transform_0, window_bounds = array<i64: 1, 16, 256>}, {transform_indices = @transform_1, window_bounds = array<i64: 1, 8, 64>}, {pipeline_mode = #tpu.pipeline_mode<synchronous>, transform_indices = @transform_2, window_bounds = array<i64: 9, 256>}, {pipeline_mode = #tpu.pipeline_mode<synchronous>, transform_indices = @transform_3, window_bounds = array<i64: 64, 256>}, {pipeline_mode = #tpu.pipeline_mode<synchronous>, transform_indices = @transform_4, window_bounds = array<i64: 8, 144>}, {pipeline_mode = #tpu.pipeline_mode<synchronous>, transform_indices = @transform_5, window_bounds = array<i64: 8, 1>}, {pipeline_mode = #tpu.pipeline_mode<synchronous>, transform_indices = @transform_6, window_bounds = array<i64: 8, 72>}, {pipeline_mode = #tpu.pipeline_mode<synchronous>, transform_indices = @transform_7, window_bounds = array<i64: 8, 1>}, {pipeline_mode = #tpu.pipeline_mode<synchronous>, transform_indices = @transform_8, window_bounds = array<i64: 8, 72>}, {pipeline_mode = #tpu.pipeline_mode<synchronous>, transform_indices = @transform_9, window_bounds = array<i64: 8, 1>}, {pipeline_mode = #tpu.pipeline_mode<synchronous>, transform_indices = @transform_10, window_bounds = array<i64: 8, 72>}, {pipeline_mode = #tpu.pipeline_mode<synchronous>, transform_indices = @transform_11, window_bounds = array<i64: 8, 1>}, {pipeline_mode = #tpu.pipeline_mode<synchronous>, transform_indices = @transform_12, window_bounds = array<i64: 8, 72>}, {pipeline_mode = #tpu.pipeline_mode<synchronous>, transform_indices = @transform_13, window_bounds = array<i64: 8, 1>}, {transform_indices = @transform_14, window_bounds = array<i64: 1, 8, 256>}]} {
    %c0 = arith.constant 0 : index
    %c0_0 = arith.constant 0 : index
    %0 = vector.load %arg3[%c0, %c0_0] : memref<9x256xf32, #tpu.memory_space<vmem>>, vector<9x256xf32>
    %c0_1 = arith.constant 0 : index
    %c0_2 = arith.constant 0 : index
    %c0_3 = arith.constant 0 : index
    %1 = vector.load %arg1[%c0_1, %c0_2, %c0_3] : memref<1x16x256xf32, #tpu.memory_space<vmem>>, vector<1x16x256xf32>
    %2 = vector.shape_cast %1 : vector<1x16x256xf32> to vector<16x256xf32>
    %c17_i32 = arith.constant 17 : i32
    %3 = tpu.dynamic_rotate %2 by %c17_i32 dim 1 : vector<16x256xf32>, i32 -> vector<16x256xf32>
    %4 = vector.extract_strided_slice %0 {offsets = [0, 0], sizes = [1, 256], strides = [1, 1]} : vector<9x256xf32> to vector<1x256xf32>
    %5 = vector.broadcast %4 : vector<1x256xf32> to vector<16x256xf32>
    %6 = arith.mulf %3, %5 : vector<16x256xf32>
    %c0_4 = arith.constant 0 : index
    %c0_5 = arith.constant 0 : index
    %7 = vector.load %arg16[%c0_4, %c0_5] : memref<144x256xf32, #tpu.memory_space<vmem>>, vector<16x256xf32>
    tpu.vector_store %arg16[%c0_4, %c0_5], %6 {strides = array<i32>} : memref<144x256xf32, #tpu.memory_space<vmem>>, vector<16x256xf32>,
    %c16_i32 = arith.constant 16 : i32
    %8 = tpu.dynamic_rotate %2 by %c16_i32 dim 1 : vector<16x256xf32>, i32 -> vector<16x256xf32>
    %9 = vector.extract_strided_slice %0 {offsets = [1, 0], sizes = [1, 256], strides = [1, 1]} : vector<9x256xf32> to vector<1x256xf32>
    %10 = vector.broadcast %9 : vector<1x256xf32> to vector<16x256xf32>
    %11 = arith.mulf %8, %10 : vector<16x256xf32>
    %c16 = arith.constant 16 : index
    %c0_6 = arith.constant 0 : index
    %12 = vector.load %arg16[%c16, %c0_6] : memref<144x256xf32, #tpu.memory_space<vmem>>, vector<16x256xf32>
    tpu.vector_store %arg16[%c16, %c0_6], %11 {strides = array<i32>} : memref<144x256xf32, #tpu.memory_space<vmem>>, vector<16x256xf32>,
    %c15_i32 = arith.constant 15 : i32
    %13 = tpu.dynamic_rotate %2 by %c15_i32 dim 1 : vector<16x256xf32>, i32 -> vector<16x256xf32>
    %14 = vector.extract_strided_slice %0 {offsets = [2, 0], sizes = [1, 256], strides = [1, 1]} : vector<9x256xf32> to vector<1x256xf32>
    %15 = vector.broadcast %14 : vector<1x256xf32> to vector<16x256xf32>
    %16 = arith.mulf %13, %15 : vector<16x256xf32>
    %c32 = arith.constant 32 : index
    %c0_7 = arith.constant 0 : index
    %17 = vector.load %arg16[%c32, %c0_7] : memref<144x256xf32, #tpu.memory_space<vmem>>, vector<16x256xf32>
    tpu.vector_store %arg16[%c32, %c0_7], %16 {strides = array<i32>} : memref<144x256xf32, #tpu.memory_space<vmem>>, vector<16x256xf32>,
    %c1_i32 = arith.constant 1 : i32
    %18 = tpu.dynamic_rotate %2 by %c1_i32 dim 1 : vector<16x256xf32>, i32 -> vector<16x256xf32>
    %19 = vector.extract_strided_slice %0 {offsets = [3, 0], sizes = [1, 256], strides = [1, 1]} : vector<9x256xf32> to vector<1x256xf32>
    %20 = vector.broadcast %19 : vector<1x256xf32> to vector<16x256xf32>
    %21 = arith.mulf %18, %20 : vector<16x256xf32>
    %c48 = arith.constant 48 : index
    %c0_8 = arith.constant 0 : index
    %22 = vector.load %arg16[%c48, %c0_8] : memref<144x256xf32, #tpu.memory_space<vmem>>, vector<16x256xf32>
    tpu.vector_store %arg16[%c48, %c0_8], %21 {strides = array<i32>} : memref<144x256xf32, #tpu.memory_space<vmem>>, vector<16x256xf32>,
    %c64 = arith.constant 64 : index
    %c0_9 = arith.constant 0 : index
    %23 = vector.load %arg16[%c64, %c0_9] : memref<144x256xf32, #tpu.memory_space<vmem>>, vector<16x256xf32>
    tpu.vector_store %arg16[%c64, %c0_9], %2 {strides = array<i32>} : memref<144x256xf32, #tpu.memory_space<vmem>>, vector<16x256xf32>,
    %c255_i32 = arith.constant 255 : i32
    %24 = tpu.dynamic_rotate %2 by %c255_i32 dim 1 : vector<16x256xf32>, i32 -> vector<16x256xf32>
    %25 = vector.extract_strided_slice %0 {offsets = [5, 0], sizes = [1, 256], strides = [1, 1]} : vector<9x256xf32> to vector<1x256xf32>
    %26 = vector.broadcast %25 : vector<1x256xf32> to vector<16x256xf32>
    %27 = arith.mulf %24, %26 : vector<16x256xf32>
    %c80 = arith.constant 80 : index
    %c0_10 = arith.constant 0 : index
    %28 = vector.load %arg16[%c80, %c0_10] : memref<144x256xf32, #tpu.memory_space<vmem>>, vector<16x256xf32>
    tpu.vector_store %arg16[%c80, %c0_10], %27 {strides = array<i32>} : memref<144x256xf32, #tpu.memory_space<vmem>>, vector<16x256xf32>,
    %c241_i32 = arith.constant 241 : i32
    %29 = tpu.dynamic_rotate %2 by %c241_i32 dim 1 : vector<16x256xf32>, i32 -> vector<16x256xf32>
    %30 = vector.extract_strided_slice %0 {offsets = [6, 0], sizes = [1, 256], strides = [1, 1]} : vector<9x256xf32> to vector<1x256xf32>
    %31 = vector.broadcast %30 : vector<1x256xf32> to vector<16x256xf32>
    %32 = arith.mulf %29, %31 : vector<16x256xf32>
    %c96 = arith.constant 96 : index
    %c0_11 = arith.constant 0 : index
    %33 = vector.load %arg16[%c96, %c0_11] : memref<144x256xf32, #tpu.memory_space<vmem>>, vector<16x256xf32>
    tpu.vector_store %arg16[%c96, %c0_11], %32 {strides = array<i32>} : memref<144x256xf32, #tpu.memory_space<vmem>>, vector<16x256xf32>,
    %c240_i32 = arith.constant 240 : i32
    %34 = tpu.dynamic_rotate %2 by %c240_i32 dim 1 : vector<16x256xf32>, i32 -> vector<16x256xf32>
    %35 = vector.extract_strided_slice %0 {offsets = [7, 0], sizes = [1, 256], strides = [1, 1]} : vector<9x256xf32> to vector<1x256xf32>
    %36 = vector.broadcast %35 : vector<1x256xf32> to vector<16x256xf32>
    %37 = arith.mulf %34, %36 : vector<16x256xf32>
    %c112 = arith.constant 112 : index
    %c0_12 = arith.constant 0 : index
    %38 = vector.load %arg16[%c112, %c0_12] : memref<144x256xf32, #tpu.memory_space<vmem>>, vector<16x256xf32>
    tpu.vector_store %arg16[%c112, %c0_12], %37 {strides = array<i32>} : memref<144x256xf32, #tpu.memory_space<vmem>>, vector<16x256xf32>,
    %c239_i32 = arith.constant 239 : i32
    %39 = tpu.dynamic_rotate %2 by %c239_i32 dim 1 : vector<16x256xf32>, i32 -> vector<16x256xf32>
    %40 = vector.extract_strided_slice %0 {offsets = [8, 0], sizes = [1, 256], strides = [1, 1]} : vector<9x256xf32> to vector<1x256xf32>
    %41 = vector.broadcast %40 : vector<1x256xf32> to vector<16x256xf32>
    %42 = arith.mulf %39, %41 : vector<16x256xf32>
    %c128 = arith.constant 128 : index
    %c0_13 = arith.constant 0 : index
    %43 = vector.load %arg16[%c128, %c0_13] : memref<144x256xf32, #tpu.memory_space<vmem>>, vector<16x256xf32>
    tpu.vector_store %arg16[%c128, %c0_13], %42 {strides = array<i32>} : memref<144x256xf32, #tpu.memory_space<vmem>>, vector<16x256xf32>,
    %c0_14 = arith.constant 0 : index
    %c0_15 = arith.constant 0 : index
    %44 = vector.load %arg16[%c0_14, %c0_15] : memref<144x256xf32, #tpu.memory_space<vmem>>, vector<144x256xf32>
    %c0_16 = arith.constant 0 : index
    %c0_17 = arith.constant 0 : index
    %45 = vector.load %arg5[%c0_16, %c0_17] : memref<8x144xf32, #tpu.memory_space<vmem>>, vector<8x144xf32>
    %cst = arith.constant dense<0.000000e+00> : vector<8x256xf32>
    %46 = tpu.matmul %45, %44, %cst {dimension_numbers = #tpu.dot_dimension_numbers<[1], [0], [0], [1], [0, 0, 1, 1], [], []>} : vector<8x144xf32>, vector<144x256xf32>, vector<8x256xf32> -> vector<8x256xf32>
    %c0_18 = arith.constant 0 : index
    %c0_19 = arith.constant 0 : index
    %47 = vector.load %arg6[%c0_18, %c0_19] : memref<8x1xf32, #tpu.memory_space<vmem>>, vector<8x1xf32>
    %48 = vector.broadcast %47 : vector<8x1xf32> to vector<8x256xf32>
    %49 = arith.addf %46, %48 : vector<8x256xf32>
    %cst_20 = arith.constant 0.000000e+00 : f32
    %50 = vector.broadcast %cst_20 : f32 to vector<8x256xf32>
    %51 = arith.maximumf %49, %50 : vector<8x256xf32>
    %c17_i32_21 = arith.constant 17 : i32
    %52 = tpu.dynamic_rotate %51 by %c17_i32_21 dim 1 : vector<8x256xf32>, i32 -> vector<8x256xf32>
    %53 = vector.extract_strided_slice %0 {offsets = [0, 0], sizes = [1, 256], strides = [1, 1]} : vector<9x256xf32> to vector<1x256xf32>
    %54 = vector.broadcast %53 : vector<1x256xf32> to vector<8x256xf32>
    %55 = arith.mulf %52, %54 : vector<8x256xf32>
    %c0_22 = arith.constant 0 : index
    %c0_23 = arith.constant 0 : index
    %56 = vector.load %arg16[%c0_22, %c0_23] : memref<144x256xf32, #tpu.memory_space<vmem>>, vector<8x256xf32>
    tpu.vector_store %arg16[%c0_22, %c0_23], %55 {strides = array<i32>} : memref<144x256xf32, #tpu.memory_space<vmem>>, vector<8x256xf32>,
    %c16_i32_24 = arith.constant 16 : i32
    %57 = tpu.dynamic_rotate %51 by %c16_i32_24 dim 1 : vector<8x256xf32>, i32 -> vector<8x256xf32>
    %58 = vector.extract_strided_slice %0 {offsets = [1, 0], sizes = [1, 256], strides = [1, 1]} : vector<9x256xf32> to vector<1x256xf32>
    %59 = vector.broadcast %58 : vector<1x256xf32> to vector<8x256xf32>
    %60 = arith.mulf %57, %59 : vector<8x256xf32>
    %c8 = arith.constant 8 : index
    %c0_25 = arith.constant 0 : index
    %61 = vector.load %arg16[%c8, %c0_25] : memref<144x256xf32, #tpu.memory_space<vmem>>, vector<8x256xf32>
    tpu.vector_store %arg16[%c8, %c0_25], %60 {strides = array<i32>} : memref<144x256xf32, #tpu.memory_space<vmem>>, vector<8x256xf32>,
    %c15_i32_26 = arith.constant 15 : i32
    %62 = tpu.dynamic_rotate %51 by %c15_i32_26 dim 1 : vector<8x256xf32>, i32 -> vector<8x256xf32>
    %63 = vector.extract_strided_slice %0 {offsets = [2, 0], sizes = [1, 256], strides = [1, 1]} : vector<9x256xf32> to vector<1x256xf32>
    %64 = vector.broadcast %63 : vector<1x256xf32> to vector<8x256xf32>
    %65 = arith.mulf %62, %64 : vector<8x256xf32>
    %c16_27 = arith.constant 16 : index
    %c0_28 = arith.constant 0 : index
    %66 = vector.load %arg16[%c16_27, %c0_28] : memref<144x256xf32, #tpu.memory_space<vmem>>, vector<8x256xf32>
    tpu.vector_store %arg16[%c16_27, %c0_28], %65 {strides = array<i32>} : memref<144x256xf32, #tpu.memory_space<vmem>>, vector<8x256xf32>,
    %c1_i32_29 = arith.constant 1 : i32
    %67 = tpu.dynamic_rotate %51 by %c1_i32_29 dim 1 : vector<8x256xf32>, i32 -> vector<8x256xf32>
    %68 = vector.extract_strided_slice %0 {offsets = [3, 0], sizes = [1, 256], strides = [1, 1]} : vector<9x256xf32> to vector<1x256xf32>
    %69 = vector.broadcast %68 : vector<1x256xf32> to vector<8x256xf32>
    %70 = arith.mulf %67, %69 : vector<8x256xf32>
    %c24 = arith.constant 24 : index
    %c0_30 = arith.constant 0 : index
    %71 = vector.load %arg16[%c24, %c0_30] : memref<144x256xf32, #tpu.memory_space<vmem>>, vector<8x256xf32>
    tpu.vector_store %arg16[%c24, %c0_30], %70 {strides = array<i32>} : memref<144x256xf32, #tpu.memory_space<vmem>>, vector<8x256xf32>,
    %c32_31 = arith.constant 32 : index
    %c0_32 = arith.constant 0 : index
    %72 = vector.load %arg16[%c32_31, %c0_32] : memref<144x256xf32, #tpu.memory_space<vmem>>, vector<8x256xf32>
    tpu.vector_store %arg16[%c32_31, %c0_32], %51 {strides = array<i32>} : memref<144x256xf32, #tpu.memory_space<vmem>>, vector<8x256xf32>,
    %c255_i32_33 = arith.constant 255 : i32
    %73 = tpu.dynamic_rotate %51 by %c255_i32_33 dim 1 : vector<8x256xf32>, i32 -> vector<8x256xf32>
    %74 = vector.extract_strided_slice %0 {offsets = [5, 0], sizes = [1, 256], strides = [1, 1]} : vector<9x256xf32> to vector<1x256xf32>
    %75 = vector.broadcast %74 : vector<1x256xf32> to vector<8x256xf32>
    %76 = arith.mulf %73, %75 : vector<8x256xf32>
    %c40 = arith.constant 40 : index
    %c0_34 = arith.constant 0 : index
    %77 = vector.load %arg16[%c40, %c0_34] : memref<144x256xf32, #tpu.memory_space<vmem>>, vector<8x256xf32>
    tpu.vector_store %arg16[%c40, %c0_34], %76 {strides = array<i32>} : memref<144x256xf32, #tpu.memory_space<vmem>>, vector<8x256xf32>,
    %c241_i32_35 = arith.constant 241 : i32
    %78 = tpu.dynamic_rotate %51 by %c241_i32_35 dim 1 : vector<8x256xf32>, i32 -> vector<8x256xf32>
    %79 = vector.extract_strided_slice %0 {offsets = [6, 0], sizes = [1, 256], strides = [1, 1]} : vector<9x256xf32> to vector<1x256xf32>
    %80 = vector.broadcast %79 : vector<1x256xf32> to vector<8x256xf32>
    %81 = arith.mulf %78, %80 : vector<8x256xf32>
    %c48_36 = arith.constant 48 : index
    %c0_37 = arith.constant 0 : index
    %82 = vector.load %arg16[%c48_36, %c0_37] : memref<144x256xf32, #tpu.memory_space<vmem>>, vector<8x256xf32>
    tpu.vector_store %arg16[%c48_36, %c0_37], %81 {strides = array<i32>} : memref<144x256xf32, #tpu.memory_space<vmem>>, vector<8x256xf32>,
    %c240_i32_38 = arith.constant 240 : i32
    %83 = tpu.dynamic_rotate %51 by %c240_i32_38 dim 1 : vector<8x256xf32>, i32 -> vector<8x256xf32>
    %84 = vector.extract_strided_slice %0 {offsets = [7, 0], sizes = [1, 256], strides = [1, 1]} : vector<9x256xf32> to vector<1x256xf32>
    %85 = vector.broadcast %84 : vector<1x256xf32> to vector<8x256xf32>
    %86 = arith.mulf %83, %85 : vector<8x256xf32>
    %c56 = arith.constant 56 : index
    %c0_39 = arith.constant 0 : index
    %87 = vector.load %arg16[%c56, %c0_39] : memref<144x256xf32, #tpu.memory_space<vmem>>, vector<8x256xf32>
    tpu.vector_store %arg16[%c56, %c0_39], %86 {strides = array<i32>} : memref<144x256xf32, #tpu.memory_space<vmem>>, vector<8x256xf32>,
    %c239_i32_40 = arith.constant 239 : i32
    %88 = tpu.dynamic_rotate %51 by %c239_i32_40 dim 1 : vector<8x256xf32>, i32 -> vector<8x256xf32>
    %89 = vector.extract_strided_slice %0 {offsets = [8, 0], sizes = [1, 256], strides = [1, 1]} : vector<9x256xf32> to vector<1x256xf32>
    %90 = vector.broadcast %89 : vector<1x256xf32> to vector<8x256xf32>
    %91 = arith.mulf %88, %90 : vector<8x256xf32>
    %c64_41 = arith.constant 64 : index
    %c0_42 = arith.constant 0 : index
    %92 = vector.load %arg16[%c64_41, %c0_42] : memref<144x256xf32, #tpu.memory_space<vmem>>, vector<8x256xf32>
    tpu.vector_store %arg16[%c64_41, %c0_42], %91 {strides = array<i32>} : memref<144x256xf32, #tpu.memory_space<vmem>>, vector<8x256xf32>,
    %c0_43 = arith.constant 0 : index
    %c0_44 = arith.constant 0 : index
    %93 = vector.load %arg16[%c0_43, %c0_44] : memref<144x256xf32, #tpu.memory_space<vmem>>, vector<72x256xf32>
    %c0_45 = arith.constant 0 : index
    %c0_46 = arith.constant 0 : index
    %94 = vector.load %arg7[%c0_45, %c0_46] : memref<8x72xf32, #tpu.memory_space<vmem>>, vector<8x72xf32>
    %cst_47 = arith.constant dense<0.000000e+00> : vector<8x256xf32>
    %95 = tpu.matmul %94, %93, %cst_47 {dimension_numbers = #tpu.dot_dimension_numbers<[1], [0], [0], [1], [0, 0, 1, 1], [], []>} : vector<8x72xf32>, vector<72x256xf32>, vector<8x256xf32> -> vector<8x256xf32>
    %c0_48 = arith.constant 0 : index
    %c0_49 = arith.constant 0 : index
    %96 = vector.load %arg8[%c0_48, %c0_49] : memref<8x1xf32, #tpu.memory_space<vmem>>, vector<8x1xf32>
    %97 = vector.broadcast %96 : vector<8x1xf32> to vector<8x256xf32>
    %98 = arith.addf %95, %97 : vector<8x256xf32>
    %cst_50 = arith.constant 0.000000e+00 : f32
    %99 = vector.broadcast %cst_50 : f32 to vector<8x256xf32>
    %100 = arith.maximumf %98, %99 : vector<8x256xf32>
    %c17_i32_51 = arith.constant 17 : i32
    %101 = tpu.dynamic_rotate %100 by %c17_i32_51 dim 1 : vector<8x256xf32>, i32 -> vector<8x256xf32>
    %102 = vector.extract_strided_slice %0 {offsets = [0, 0], sizes = [1, 256], strides = [1, 1]} : vector<9x256xf32> to vector<1x256xf32>
    %103 = vector.broadcast %102 : vector<1x256xf32> to vector<8x256xf32>
    %104 = arith.mulf %101, %103 : vector<8x256xf32>
    %c0_52 = arith.constant 0 : index
    %c0_53 = arith.constant 0 : index
    %105 = vector.load %arg16[%c0_52, %c0_53] : memref<144x256xf32, #tpu.memory_space<vmem>>, vector<8x256xf32>
    tpu.vector_store %arg16[%c0_52, %c0_53], %104 {strides = array<i32>} : memref<144x256xf32, #tpu.memory_space<vmem>>, vector<8x256xf32>,
    %c16_i32_54 = arith.constant 16 : i32
    %106 = tpu.dynamic_rotate %100 by %c16_i32_54 dim 1 : vector<8x256xf32>, i32 -> vector<8x256xf32>
    %107 = vector.extract_strided_slice %0 {offsets = [1, 0], sizes = [1, 256], strides = [1, 1]} : vector<9x256xf32> to vector<1x256xf32>
    %108 = vector.broadcast %107 : vector<1x256xf32> to vector<8x256xf32>
    %109 = arith.mulf %106, %108 : vector<8x256xf32>
    %c8_55 = arith.constant 8 : index
    %c0_56 = arith.constant 0 : index
    %110 = vector.load %arg16[%c8_55, %c0_56] : memref<144x256xf32, #tpu.memory_space<vmem>>, vector<8x256xf32>
    tpu.vector_store %arg16[%c8_55, %c0_56], %109 {strides = array<i32>} : memref<144x256xf32, #tpu.memory_space<vmem>>, vector<8x256xf32>,
    %c15_i32_57 = arith.constant 15 : i32
    %111 = tpu.dynamic_rotate %100 by %c15_i32_57 dim 1 : vector<8x256xf32>, i32 -> vector<8x256xf32>
    %112 = vector.extract_strided_slice %0 {offsets = [2, 0], sizes = [1, 256], strides = [1, 1]} : vector<9x256xf32> to vector<1x256xf32>
    %113 = vector.broadcast %112 : vector<1x256xf32> to vector<8x256xf32>
    %114 = arith.mulf %111, %113 : vector<8x256xf32>
    %c16_58 = arith.constant 16 : index
    %c0_59 = arith.constant 0 : index
    %115 = vector.load %arg16[%c16_58, %c0_59] : memref<144x256xf32, #tpu.memory_space<vmem>>, vector<8x256xf32>
    tpu.vector_store %arg16[%c16_58, %c0_59], %114 {strides = array<i32>} : memref<144x256xf32, #tpu.memory_space<vmem>>, vector<8x256xf32>,
    %c1_i32_60 = arith.constant 1 : i32
    %116 = tpu.dynamic_rotate %100 by %c1_i32_60 dim 1 : vector<8x256xf32>, i32 -> vector<8x256xf32>
    %117 = vector.extract_strided_slice %0 {offsets = [3, 0], sizes = [1, 256], strides = [1, 1]} : vector<9x256xf32> to vector<1x256xf32>
    %118 = vector.broadcast %117 : vector<1x256xf32> to vector<8x256xf32>
    %119 = arith.mulf %116, %118 : vector<8x256xf32>
    %c24_61 = arith.constant 24 : index
    %c0_62 = arith.constant 0 : index
    %120 = vector.load %arg16[%c24_61, %c0_62] : memref<144x256xf32, #tpu.memory_space<vmem>>, vector<8x256xf32>
    tpu.vector_store %arg16[%c24_61, %c0_62], %119 {strides = array<i32>} : memref<144x256xf32, #tpu.memory_space<vmem>>, vector<8x256xf32>,
    %c32_63 = arith.constant 32 : index
    %c0_64 = arith.constant 0 : index
    %121 = vector.load %arg16[%c32_63, %c0_64] : memref<144x256xf32, #tpu.memory_space<vmem>>, vector<8x256xf32>
    tpu.vector_store %arg16[%c32_63, %c0_64], %100 {strides = array<i32>} : memref<144x256xf32, #tpu.memory_space<vmem>>, vector<8x256xf32>,
    %c255_i32_65 = arith.constant 255 : i32
    %122 = tpu.dynamic_rotate %100 by %c255_i32_65 dim 1 : vector<8x256xf32>, i32 -> vector<8x256xf32>
    %123 = vector.extract_strided_slice %0 {offsets = [5, 0], sizes = [1, 256], strides = [1, 1]} : vector<9x256xf32> to vector<1x256xf32>
    %124 = vector.broadcast %123 : vector<1x256xf32> to vector<8x256xf32>
    %125 = arith.mulf %122, %124 : vector<8x256xf32>
    %c40_66 = arith.constant 40 : index
    %c0_67 = arith.constant 0 : index
    %126 = vector.load %arg16[%c40_66, %c0_67] : memref<144x256xf32, #tpu.memory_space<vmem>>, vector<8x256xf32>
    tpu.vector_store %arg16[%c40_66, %c0_67], %125 {strides = array<i32>} : memref<144x256xf32, #tpu.memory_space<vmem>>, vector<8x256xf32>,
    %c241_i32_68 = arith.constant 241 : i32
    %127 = tpu.dynamic_rotate %100 by %c241_i32_68 dim 1 : vector<8x256xf32>, i32 -> vector<8x256xf32>
    %128 = vector.extract_strided_slice %0 {offsets = [6, 0], sizes = [1, 256], strides = [1, 1]} : vector<9x256xf32> to vector<1x256xf32>
    %129 = vector.broadcast %128 : vector<1x256xf32> to vector<8x256xf32>
    %130 = arith.mulf %127, %129 : vector<8x256xf32>
    %c48_69 = arith.constant 48 : index
    %c0_70 = arith.constant 0 : index
    %131 = vector.load %arg16[%c48_69, %c0_70] : memref<144x256xf32, #tpu.memory_space<vmem>>, vector<8x256xf32>
    tpu.vector_store %arg16[%c48_69, %c0_70], %130 {strides = array<i32>} : memref<144x256xf32, #tpu.memory_space<vmem>>, vector<8x256xf32>,
    %c240_i32_71 = arith.constant 240 : i32
    %132 = tpu.dynamic_rotate %100 by %c240_i32_71 dim 1 : vector<8x256xf32>, i32 -> vector<8x256xf32>
    %133 = vector.extract_strided_slice %0 {offsets = [7, 0], sizes = [1, 256], strides = [1, 1]} : vector<9x256xf32> to vector<1x256xf32>
    %134 = vector.broadcast %133 : vector<1x256xf32> to vector<8x256xf32>
    %135 = arith.mulf %132, %134 : vector<8x256xf32>
    %c56_72 = arith.constant 56 : index
    %c0_73 = arith.constant 0 : index
    %136 = vector.load %arg16[%c56_72, %c0_73] : memref<144x256xf32, #tpu.memory_space<vmem>>, vector<8x256xf32>
    tpu.vector_store %arg16[%c56_72, %c0_73], %135 {strides = array<i32>} : memref<144x256xf32, #tpu.memory_space<vmem>>, vector<8x256xf32>,
    %c239_i32_74 = arith.constant 239 : i32
    %137 = tpu.dynamic_rotate %100 by %c239_i32_74 dim 1 : vector<8x256xf32>, i32 -> vector<8x256xf32>
    %138 = vector.extract_strided_slice %0 {offsets = [8, 0], sizes = [1, 256], strides = [1, 1]} : vector<9x256xf32> to vector<1x256xf32>
    %139 = vector.broadcast %138 : vector<1x256xf32> to vector<8x256xf32>
    %140 = arith.mulf %137, %139 : vector<8x256xf32>
    %c64_75 = arith.constant 64 : index
    %c0_76 = arith.constant 0 : index
    %141 = vector.load %arg16[%c64_75, %c0_76] : memref<144x256xf32, #tpu.memory_space<vmem>>, vector<8x256xf32>
    tpu.vector_store %arg16[%c64_75, %c0_76], %140 {strides = array<i32>} : memref<144x256xf32, #tpu.memory_space<vmem>>, vector<8x256xf32>,
    %c0_77 = arith.constant 0 : index
    %c0_78 = arith.constant 0 : index
    %142 = vector.load %arg16[%c0_77, %c0_78] : memref<144x256xf32, #tpu.memory_space<vmem>>, vector<72x256xf32>
    %c0_79 = arith.constant 0 : index
    %c0_80 = arith.constant 0 : index
    %143 = vector.load %arg9[%c0_79, %c0_80] : memref<8x72xf32, #tpu.memory_space<vmem>>, vector<8x72xf32>
    %cst_81 = arith.constant dense<0.000000e+00> : vector<8x256xf32>
    %144 = tpu.matmul %143, %142, %cst_81 {dimension_numbers = #tpu.dot_dimension_numbers<[1], [0], [0], [1], [0, 0, 1, 1], [], []>} : vector<8x72xf32>, vector<72x256xf32>, vector<8x256xf32> -> vector<8x256xf32>
    %c0_82 = arith.constant 0 : index
    %c0_83 = arith.constant 0 : index
    %145 = vector.load %arg10[%c0_82, %c0_83] : memref<8x1xf32, #tpu.memory_space<vmem>>, vector<8x1xf32>
    %146 = vector.broadcast %145 : vector<8x1xf32> to vector<8x256xf32>
    %147 = arith.addf %144, %146 : vector<8x256xf32>
    %148 = arith.addf %49, %147 : vector<8x256xf32>
    %c0_84 = arith.constant 0 : index
    %c0_85 = arith.constant 0 : index
    %c0_86 = arith.constant 0 : index
    %149 = vector.load %arg2[%c0_84, %c0_85, %c0_86] : memref<1x8x64xf32, #tpu.memory_space<vmem>>, vector<1x8x64xf32>
    %150 = vector.shape_cast %149 : vector<1x8x64xf32> to vector<8x64xf32>
    %c0_87 = arith.constant 0 : index
    %c0_88 = arith.constant 0 : index
    %151 = vector.load %arg4[%c0_87, %c0_88] : memref<64x256xf32, #tpu.memory_space<vmem>>, vector<64x256xf32>
    %cst_89 = arith.constant dense<0.000000e+00> : vector<8x256xf32>
    %152 = tpu.matmul %150, %151, %cst_89 {dimension_numbers = #tpu.dot_dimension_numbers<[1], [0], [0], [1], [0, 0, 1, 1], [], []>} : vector<8x64xf32>, vector<64x256xf32>, vector<8x256xf32> -> vector<8x256xf32>
    %153 = arith.addf %148, %152 : vector<8x256xf32>
    %cst_90 = arith.constant 0.000000e+00 : f32
    %154 = vector.broadcast %cst_90 : f32 to vector<8x256xf32>
    %155 = arith.maximumf %153, %154 : vector<8x256xf32>
    %c17_i32_91 = arith.constant 17 : i32
    %156 = tpu.dynamic_rotate %155 by %c17_i32_91 dim 1 : vector<8x256xf32>, i32 -> vector<8x256xf32>
    %157 = vector.extract_strided_slice %0 {offsets = [0, 0], sizes = [1, 256], strides = [1, 1]} : vector<9x256xf32> to vector<1x256xf32>
    %158 = vector.broadcast %157 : vector<1x256xf32> to vector<8x256xf32>
    %159 = arith.mulf %156, %158 : vector<8x256xf32>
    %c0_92 = arith.constant 0 : index
    %c0_93 = arith.constant 0 : index
    %160 = vector.load %arg16[%c0_92, %c0_93] : memref<144x256xf32, #tpu.memory_space<vmem>>, vector<8x256xf32>
    tpu.vector_store %arg16[%c0_92, %c0_93], %159 {strides = array<i32>} : memref<144x256xf32, #tpu.memory_space<vmem>>, vector<8x256xf32>,
    %c16_i32_94 = arith.constant 16 : i32
    %161 = tpu.dynamic_rotate %155 by %c16_i32_94 dim 1 : vector<8x256xf32>, i32 -> vector<8x256xf32>
    %162 = vector.extract_strided_slice %0 {offsets = [1, 0], sizes = [1, 256], strides = [1, 1]} : vector<9x256xf32> to vector<1x256xf32>
    %163 = vector.broadcast %162 : vector<1x256xf32> to vector<8x256xf32>
    %164 = arith.mulf %161, %163 : vector<8x256xf32>
    %c8_95 = arith.constant 8 : index
    %c0_96 = arith.constant 0 : index
    %165 = vector.load %arg16[%c8_95, %c0_96] : memref<144x256xf32, #tpu.memory_space<vmem>>, vector<8x256xf32>
    tpu.vector_store %arg16[%c8_95, %c0_96], %164 {strides = array<i32>} : memref<144x256xf32, #tpu.memory_space<vmem>>, vector<8x256xf32>,
    %c15_i32_97 = arith.constant 15 : i32
    %166 = tpu.dynamic_rotate %155 by %c15_i32_97 dim 1 : vector<8x256xf32>, i32 -> vector<8x256xf32>
    %167 = vector.extract_strided_slice %0 {offsets = [2, 0], sizes = [1, 256], strides = [1, 1]} : vector<9x256xf32> to vector<1x256xf32>
    %168 = vector.broadcast %167 : vector<1x256xf32> to vector<8x256xf32>
    %169 = arith.mulf %166, %168 : vector<8x256xf32>
    %c16_98 = arith.constant 16 : index
    %c0_99 = arith.constant 0 : index
    %170 = vector.load %arg16[%c16_98, %c0_99] : memref<144x256xf32, #tpu.memory_space<vmem>>, vector<8x256xf32>
    tpu.vector_store %arg16[%c16_98, %c0_99], %169 {strides = array<i32>} : memref<144x256xf32, #tpu.memory_space<vmem>>, vector<8x256xf32>,
    %c1_i32_100 = arith.constant 1 : i32
    %171 = tpu.dynamic_rotate %155 by %c1_i32_100 dim 1 : vector<8x256xf32>, i32 -> vector<8x256xf32>
    %172 = vector.extract_strided_slice %0 {offsets = [3, 0], sizes = [1, 256], strides = [1, 1]} : vector<9x256xf32> to vector<1x256xf32>
    %173 = vector.broadcast %172 : vector<1x256xf32> to vector<8x256xf32>
    %174 = arith.mulf %171, %173 : vector<8x256xf32>
    %c24_101 = arith.constant 24 : index
    %c0_102 = arith.constant 0 : index
    %175 = vector.load %arg16[%c24_101, %c0_102] : memref<144x256xf32, #tpu.memory_space<vmem>>, vector<8x256xf32>
    tpu.vector_store %arg16[%c24_101, %c0_102], %174 {strides = array<i32>} : memref<144x256xf32, #tpu.memory_space<vmem>>, vector<8x256xf32>,
    %c32_103 = arith.constant 32 : index
    %c0_104 = arith.constant 0 : index
    %176 = vector.load %arg16[%c32_103, %c0_104] : memref<144x256xf32, #tpu.memory_space<vmem>>, vector<8x256xf32>
    tpu.vector_store %arg16[%c32_103, %c0_104], %155 {strides = array<i32>} : memref<144x256xf32, #tpu.memory_space<vmem>>, vector<8x256xf32>,
    %c255_i32_105 = arith.constant 255 : i32
    %177 = tpu.dynamic_rotate %155 by %c255_i32_105 dim 1 : vector<8x256xf32>, i32 -> vector<8x256xf32>
    %178 = vector.extract_strided_slice %0 {offsets = [5, 0], sizes = [1, 256], strides = [1, 1]} : vector<9x256xf32> to vector<1x256xf32>
    %179 = vector.broadcast %178 : vector<1x256xf32> to vector<8x256xf32>
    %180 = arith.mulf %177, %179 : vector<8x256xf32>
    %c40_106 = arith.constant 40 : index
    %c0_107 = arith.constant 0 : index
    %181 = vector.load %arg16[%c40_106, %c0_107] : memref<144x256xf32, #tpu.memory_space<vmem>>, vector<8x256xf32>
    tpu.vector_store %arg16[%c40_106, %c0_107], %180 {strides = array<i32>} : memref<144x256xf32, #tpu.memory_space<vmem>>, vector<8x256xf32>,
    %c241_i32_108 = arith.constant 241 : i32
    %182 = tpu.dynamic_rotate %155 by %c241_i32_108 dim 1 : vector<8x256xf32>, i32 -> vector<8x256xf32>
    %183 = vector.extract_strided_slice %0 {offsets = [6, 0], sizes = [1, 256], strides = [1, 1]} : vector<9x256xf32> to vector<1x256xf32>
    %184 = vector.broadcast %183 : vector<1x256xf32> to vector<8x256xf32>
    %185 = arith.mulf %182, %184 : vector<8x256xf32>
    %c48_109 = arith.constant 48 : index
    %c0_110 = arith.constant 0 : index
    %186 = vector.load %arg16[%c48_109, %c0_110] : memref<144x256xf32, #tpu.memory_space<vmem>>, vector<8x256xf32>
    tpu.vector_store %arg16[%c48_109, %c0_110], %185 {strides = array<i32>} : memref<144x256xf32, #tpu.memory_space<vmem>>, vector<8x256xf32>,
    %c240_i32_111 = arith.constant 240 : i32
    %187 = tpu.dynamic_rotate %155 by %c240_i32_111 dim 1 : vector<8x256xf32>, i32 -> vector<8x256xf32>
    %188 = vector.extract_strided_slice %0 {offsets = [7, 0], sizes = [1, 256], strides = [1, 1]} : vector<9x256xf32> to vector<1x256xf32>
    %189 = vector.broadcast %188 : vector<1x256xf32> to vector<8x256xf32>
    %190 = arith.mulf %187, %189 : vector<8x256xf32>
    %c56_112 = arith.constant 56 : index
    %c0_113 = arith.constant 0 : index
    %191 = vector.load %arg16[%c56_112, %c0_113] : memref<144x256xf32, #tpu.memory_space<vmem>>, vector<8x256xf32>
    tpu.vector_store %arg16[%c56_112, %c0_113], %190 {strides = array<i32>} : memref<144x256xf32, #tpu.memory_space<vmem>>, vector<8x256xf32>,
    %c239_i32_114 = arith.constant 239 : i32
    %192 = tpu.dynamic_rotate %155 by %c239_i32_114 dim 1 : vector<8x256xf32>, i32 -> vector<8x256xf32>
    %193 = vector.extract_strided_slice %0 {offsets = [8, 0], sizes = [1, 256], strides = [1, 1]} : vector<9x256xf32> to vector<1x256xf32>
    %194 = vector.broadcast %193 : vector<1x256xf32> to vector<8x256xf32>
    %195 = arith.mulf %192, %194 : vector<8x256xf32>
    %c64_115 = arith.constant 64 : index
    %c0_116 = arith.constant 0 : index
    %196 = vector.load %arg16[%c64_115, %c0_116] : memref<144x256xf32, #tpu.memory_space<vmem>>, vector<8x256xf32>
    tpu.vector_store %arg16[%c64_115, %c0_116], %195 {strides = array<i32>} : memref<144x256xf32, #tpu.memory_space<vmem>>, vector<8x256xf32>,
    %c0_117 = arith.constant 0 : index
    %c0_118 = arith.constant 0 : index
    %197 = vector.load %arg16[%c0_117, %c0_118] : memref<144x256xf32, #tpu.memory_space<vmem>>, vector<72x256xf32>
    %c0_119 = arith.constant 0 : index
    %c0_120 = arith.constant 0 : index
    %198 = vector.load %arg11[%c0_119, %c0_120] : memref<8x72xf32, #tpu.memory_space<vmem>>, vector<8x72xf32>
    %cst_121 = arith.constant dense<0.000000e+00> : vector<8x256xf32>
    %199 = tpu.matmul %198, %197, %cst_121 {dimension_numbers = #tpu.dot_dimension_numbers<[1], [0], [0], [1], [0, 0, 1, 1], [], []>} : vector<8x72xf32>, vector<72x256xf32>, vector<8x256xf32> -> vector<8x256xf32>
    %c0_122 = arith.constant 0 : index
    %c0_123 = arith.constant 0 : index
    %200 = vector.load %arg12[%c0_122, %c0_123] : memref<8x1xf32, #tpu.memory_space<vmem>>, vector<8x1xf32>
    %201 = vector.broadcast %200 : vector<8x1xf32> to vector<8x256xf32>
    %202 = arith.addf %199, %201 : vector<8x256xf32>
    %cst_124 = arith.constant 0.000000e+00 : f32
    %203 = vector.broadcast %cst_124 : f32 to vector<8x256xf32>
    %204 = arith.maximumf %202, %203 : vector<8x256xf32>
    %c17_i32_125 = arith.constant 17 : i32
    %205 = tpu.dynamic_rotate %204 by %c17_i32_125 dim 1 : vector<8x256xf32>, i32 -> vector<8x256xf32>
    %206 = vector.extract_strided_slice %0 {offsets = [0, 0], sizes = [1, 256], strides = [1, 1]} : vector<9x256xf32> to vector<1x256xf32>
    %207 = vector.broadcast %206 : vector<1x256xf32> to vector<8x256xf32>
    %208 = arith.mulf %205, %207 : vector<8x256xf32>
    %c0_126 = arith.constant 0 : index
    %c0_127 = arith.constant 0 : index
    %209 = vector.load %arg16[%c0_126, %c0_127] : memref<144x256xf32, #tpu.memory_space<vmem>>, vector<8x256xf32>
    tpu.vector_store %arg16[%c0_126, %c0_127], %208 {strides = array<i32>} : memref<144x256xf32, #tpu.memory_space<vmem>>, vector<8x256xf32>,
    %c16_i32_128 = arith.constant 16 : i32
    %210 = tpu.dynamic_rotate %204 by %c16_i32_128 dim 1 : vector<8x256xf32>, i32 -> vector<8x256xf32>
    %211 = vector.extract_strided_slice %0 {offsets = [1, 0], sizes = [1, 256], strides = [1, 1]} : vector<9x256xf32> to vector<1x256xf32>
    %212 = vector.broadcast %211 : vector<1x256xf32> to vector<8x256xf32>
    %213 = arith.mulf %210, %212 : vector<8x256xf32>
    %c8_129 = arith.constant 8 : index
    %c0_130 = arith.constant 0 : index
    %214 = vector.load %arg16[%c8_129, %c0_130] : memref<144x256xf32, #tpu.memory_space<vmem>>, vector<8x256xf32>
    tpu.vector_store %arg16[%c8_129, %c0_130], %213 {strides = array<i32>} : memref<144x256xf32, #tpu.memory_space<vmem>>, vector<8x256xf32>,
    %c15_i32_131 = arith.constant 15 : i32
    %215 = tpu.dynamic_rotate %204 by %c15_i32_131 dim 1 : vector<8x256xf32>, i32 -> vector<8x256xf32>
    %216 = vector.extract_strided_slice %0 {offsets = [2, 0], sizes = [1, 256], strides = [1, 1]} : vector<9x256xf32> to vector<1x256xf32>
    %217 = vector.broadcast %216 : vector<1x256xf32> to vector<8x256xf32>
    %218 = arith.mulf %215, %217 : vector<8x256xf32>
    %c16_132 = arith.constant 16 : index
    %c0_133 = arith.constant 0 : index
    %219 = vector.load %arg16[%c16_132, %c0_133] : memref<144x256xf32, #tpu.memory_space<vmem>>, vector<8x256xf32>
    tpu.vector_store %arg16[%c16_132, %c0_133], %218 {strides = array<i32>} : memref<144x256xf32, #tpu.memory_space<vmem>>, vector<8x256xf32>,
    %c1_i32_134 = arith.constant 1 : i32
    %220 = tpu.dynamic_rotate %204 by %c1_i32_134 dim 1 : vector<8x256xf32>, i32 -> vector<8x256xf32>
    %221 = vector.extract_strided_slice %0 {offsets = [3, 0], sizes = [1, 256], strides = [1, 1]} : vector<9x256xf32> to vector<1x256xf32>
    %222 = vector.broadcast %221 : vector<1x256xf32> to vector<8x256xf32>
    %223 = arith.mulf %220, %222 : vector<8x256xf32>
    %c24_135 = arith.constant 24 : index
    %c0_136 = arith.constant 0 : index
    %224 = vector.load %arg16[%c24_135, %c0_136] : memref<144x256xf32, #tpu.memory_space<vmem>>, vector<8x256xf32>
    tpu.vector_store %arg16[%c24_135, %c0_136], %223 {strides = array<i32>} : memref<144x256xf32, #tpu.memory_space<vmem>>, vector<8x256xf32>,
    %c32_137 = arith.constant 32 : index
    %c0_138 = arith.constant 0 : index
    %225 = vector.load %arg16[%c32_137, %c0_138] : memref<144x256xf32, #tpu.memory_space<vmem>>, vector<8x256xf32>
    tpu.vector_store %arg16[%c32_137, %c0_138], %204 {strides = array<i32>} : memref<144x256xf32, #tpu.memory_space<vmem>>, vector<8x256xf32>,
    %c255_i32_139 = arith.constant 255 : i32
    %226 = tpu.dynamic_rotate %204 by %c255_i32_139 dim 1 : vector<8x256xf32>, i32 -> vector<8x256xf32>
    %227 = vector.extract_strided_slice %0 {offsets = [5, 0], sizes = [1, 256], strides = [1, 1]} : vector<9x256xf32> to vector<1x256xf32>
    %228 = vector.broadcast %227 : vector<1x256xf32> to vector<8x256xf32>
    %229 = arith.mulf %226, %228 : vector<8x256xf32>
    %c40_140 = arith.constant 40 : index
    %c0_141 = arith.constant 0 : index
    %230 = vector.load %arg16[%c40_140, %c0_141] : memref<144x256xf32, #tpu.memory_space<vmem>>, vector<8x256xf32>
    tpu.vector_store %arg16[%c40_140, %c0_141], %229 {strides = array<i32>} : memref<144x256xf32, #tpu.memory_space<vmem>>, vector<8x256xf32>,
    %c241_i32_142 = arith.constant 241 : i32
    %231 = tpu.dynamic_rotate %204 by %c241_i32_142 dim 1 : vector<8x256xf32>, i32 -> vector<8x256xf32>
    %232 = vector.extract_strided_slice %0 {offsets = [6, 0], sizes = [1, 256], strides = [1, 1]} : vector<9x256xf32> to vector<1x256xf32>
    %233 = vector.broadcast %232 : vector<1x256xf32> to vector<8x256xf32>
    %234 = arith.mulf %231, %233 : vector<8x256xf32>
    %c48_143 = arith.constant 48 : index
    %c0_144 = arith.constant 0 : index
    %235 = vector.load %arg16[%c48_143, %c0_144] : memref<144x256xf32, #tpu.memory_space<vmem>>, vector<8x256xf32>
    tpu.vector_store %arg16[%c48_143, %c0_144], %234 {strides = array<i32>} : memref<144x256xf32, #tpu.memory_space<vmem>>, vector<8x256xf32>,
    %c240_i32_145 = arith.constant 240 : i32
    %236 = tpu.dynamic_rotate %204 by %c240_i32_145 dim 1 : vector<8x256xf32>, i32 -> vector<8x256xf32>
    %237 = vector.extract_strided_slice %0 {offsets = [7, 0], sizes = [1, 256], strides = [1, 1]} : vector<9x256xf32> to vector<1x256xf32>
    %238 = vector.broadcast %237 : vector<1x256xf32> to vector<8x256xf32>
    %239 = arith.mulf %236, %238 : vector<8x256xf32>
    %c56_146 = arith.constant 56 : index
    %c0_147 = arith.constant 0 : index
    %240 = vector.load %arg16[%c56_146, %c0_147] : memref<144x256xf32, #tpu.memory_space<vmem>>, vector<8x256xf32>
    tpu.vector_store %arg16[%c56_146, %c0_147], %239 {strides = array<i32>} : memref<144x256xf32, #tpu.memory_space<vmem>>, vector<8x256xf32>,
    %c239_i32_148 = arith.constant 239 : i32
    %241 = tpu.dynamic_rotate %204 by %c239_i32_148 dim 1 : vector<8x256xf32>, i32 -> vector<8x256xf32>
    %242 = vector.extract_strided_slice %0 {offsets = [8, 0], sizes = [1, 256], strides = [1, 1]} : vector<9x256xf32> to vector<1x256xf32>
    %243 = vector.broadcast %242 : vector<1x256xf32> to vector<8x256xf32>
    %244 = arith.mulf %241, %243 : vector<8x256xf32>
    %c64_149 = arith.constant 64 : index
    %c0_150 = arith.constant 0 : index
    %245 = vector.load %arg16[%c64_149, %c0_150] : memref<144x256xf32, #tpu.memory_space<vmem>>, vector<8x256xf32>
    tpu.vector_store %arg16[%c64_149, %c0_150], %244 {strides = array<i32>} : memref<144x256xf32, #tpu.memory_space<vmem>>, vector<8x256xf32>,
    %c0_151 = arith.constant 0 : index
    %c0_152 = arith.constant 0 : index
    %246 = vector.load %arg16[%c0_151, %c0_152] : memref<144x256xf32, #tpu.memory_space<vmem>>, vector<72x256xf32>
    %c0_153 = arith.constant 0 : index
    %c0_154 = arith.constant 0 : index
    %247 = vector.load %arg13[%c0_153, %c0_154] : memref<8x72xf32, #tpu.memory_space<vmem>>, vector<8x72xf32>
    %cst_155 = arith.constant dense<0.000000e+00> : vector<8x256xf32>
    %248 = tpu.matmul %247, %246, %cst_155 {dimension_numbers = #tpu.dot_dimension_numbers<[1], [0], [0], [1], [0, 0, 1, 1], [], []>} : vector<8x72xf32>, vector<72x256xf32>, vector<8x256xf32> -> vector<8x256xf32>
    %c0_156 = arith.constant 0 : index
    %c0_157 = arith.constant 0 : index
    %249 = vector.load %arg14[%c0_156, %c0_157] : memref<8x1xf32, #tpu.memory_space<vmem>>, vector<8x1xf32>
    %250 = vector.broadcast %249 : vector<8x1xf32> to vector<8x256xf32>
    %251 = arith.addf %248, %250 : vector<8x256xf32>
    %252 = arith.addf %153, %251 : vector<8x256xf32>
    %c0_158 = arith.constant 0 : index
    %c0_159 = arith.constant 0 : index
    %c0_160 = arith.constant 0 : index
    %253 = vector.load %arg15[%c0_158, %c0_159, %c0_160] : memref<1x8x256xf32, #tpu.memory_space<vmem>>, vector<1x8x256xf32>
    %254 = vector.shape_cast %253 : vector<1x8x256xf32> to vector<8x256xf32>
    %255 = vector.shape_cast %252 : vector<8x256xf32> to vector<1x8x256xf32>
    tpu.vector_store %arg15[%c0_158, %c0_159, %c0_160], %255 {strides = array<i32>} : memref<1x8x256xf32, #tpu.memory_space<vmem>>, vector<1x8x256xf32>,
    return
  }
  func.func @transform_0(%arg0: i32) -> (i32, i32, i32) {
    %c0_i32 = arith.constant 0 : i32
    %c0_i32_0 = arith.constant 0 : i32
    %c0_i32_1 = arith.constant 0 : i32
    return %arg0, %c0_i32, %c0_i32_0 : i32, i32, i32
  }
  func.func @transform_1(%arg0: i32) -> (i32, i32, i32) {
    %c0_i32 = arith.constant 0 : i32
    %c0_i32_0 = arith.constant 0 : i32
    %c0_i32_1 = arith.constant 0 : i32
    return %arg0, %c0_i32, %c0_i32_0 : i32, i32, i32
  }
  func.func @transform_2(%arg0: i32) -> (i32, i32) {
    %c0_i32 = arith.constant 0 : i32
    %c0_i32_0 = arith.constant 0 : i32
    %c0_i32_1 = arith.constant 0 : i32
    return %c0_i32, %c0_i32_0 : i32, i32
  }
  func.func @transform_3(%arg0: i32) -> (i32, i32) {
    %c0_i32 = arith.constant 0 : i32
    %c0_i32_0 = arith.constant 0 : i32
    %c0_i32_1 = arith.constant 0 : i32
    return %c0_i32, %c0_i32_0 : i32, i32
  }
  func.func @transform_4(%arg0: i32) -> (i32, i32) {
    %c0_i32 = arith.constant 0 : i32
    %c0_i32_0 = arith.constant 0 : i32
    %c0_i32_1 = arith.constant 0 : i32
    return %c0_i32, %c0_i32_0 : i32, i32
  }
  func.func @transform_5(%arg0: i32) -> (i32, i32) {
    %c0_i32 = arith.constant 0 : i32
    %c0_i32_0 = arith.constant 0 : i32
    %c0_i32_1 = arith.constant 0 : i32
    return %c0_i32, %c0_i32_0 : i32, i32
  }
  func.func @transform_6(%arg0: i32) -> (i32, i32) {
    %c0_i32 = arith.constant 0 : i32
    %c0_i32_0 = arith.constant 0 : i32
    %c0_i32_1 = arith.constant 0 : i32
    return %c0_i32, %c0_i32_0 : i32, i32
  }
  func.func @transform_7(%arg0: i32) -> (i32, i32) {
    %c0_i32 = arith.constant 0 : i32
    %c0_i32_0 = arith.constant 0 : i32
    %c0_i32_1 = arith.constant 0 : i32
    return %c0_i32, %c0_i32_0 : i32, i32
  }
  func.func @transform_8(%arg0: i32) -> (i32, i32) {
    %c0_i32 = arith.constant 0 : i32
    %c0_i32_0 = arith.constant 0 : i32
    %c0_i32_1 = arith.constant 0 : i32
    return %c0_i32, %c0_i32_0 : i32, i32
  }
  func.func @transform_9(%arg0: i32) -> (i32, i32) {
    %c0_i32 = arith.constant 0 : i32
    %c0_i32_0 = arith.constant 0 : i32
    %c0_i32_1 = arith.constant 0 : i32
    return %c0_i32, %c0_i32_0 : i32, i32
  }
  func.func @transform_10(%arg0: i32) -> (i32, i32) {
    %c0_i32 = arith.constant 0 : i32
    %c0_i32_0 = arith.constant 0 : i32
    %c0_i32_1 = arith.constant 0 : i32
    return %c0_i32, %c0_i32_0 : i32, i32
  }
  func.func @transform_11(%arg0: i32) -> (i32, i32) {
    %c0_i32 = arith.constant 0 : i32
    %c0_i32_0 = arith.constant 0 : i32
    %c0_i32_1 = arith.constant 0 : i32
    return %c0_i32, %c0_i32_0 : i32, i32
  }
  func.func @transform_12(%arg0: i32) -> (i32, i32) {
    %c0_i32 = arith.constant 0 : i32
    %c0_i32_0 = arith.constant 0 : i32
    %c0_i32_1 = arith.constant 0 : i32
    return %c0_i32, %c0_i32_0 : i32, i32
  }
  func.func @transform_13(%arg0: i32) -> (i32, i32) {
    %c0_i32 = arith.constant 0 : i32
    %c0_i32_0 = arith.constant 0 : i32
    %c0_i32_1 = arith.constant 0 : i32
    return %c0_i32, %c0_i32_0 : i32, i32
  }
  func.func @transform_14(%arg0: i32) -> (i32, i32, i32) {
    %c0_i32 = arith.constant 0 : i32
    %c0_i32_0 = arith.constant 0 : i32
    %c0_i32_1 = arith.constant 0 : i32
    return %arg0, %c0_i32, %c0_i32_0 : i32, i32, i32
  }
}

</mosaic_0001>

<llo_original>
// kernel: refine_forward.1
$region0: #{refine_forward.1}
  #allocation0 [shape = 'u32[]', space=smem, size = 0x4, offset = 0x4, fixed_abs, tag = 'smem constant byte address 0x4 - core index']
  #allocation1 [shape = 'u32[144,128]{1,0:T(1,128)}', space=vmem, size = 0x12000, scoped, tag = 'internal scratch']
  #allocation2 [shape = 'f32[144,256]{1,0:T(8,128)}', space=vmem, size = 0x24000, scoped, tag = 'scratch operand']
  %s0 = inlined_call_operand.vmem [shape: f32[2,16,256], index: 0, kind: input, shape index: {}]
  %s1 = inlined_call_operand.vmem [shape: f32[2,8,64], index: 1, kind: input, shape index: {}]
  %s2 = inlined_call_operand.vmem [shape: f32[9,256], index: 2, kind: input, shape index: {}]
  %s3 = inlined_call_operand.vmem [shape: f32[64,256], index: 3, kind: input, shape index: {}]
  %s4 = inlined_call_operand.vmem [shape: f32[8,144], index: 4, kind: input, shape index: {}]
  %s5 = inlined_call_operand.vmem [shape: f32[8,1], index: 5, kind: input, shape index: {}]
  %s6 = inlined_call_operand.vmem [shape: f32[8,72], index: 6, kind: input, shape index: {}]
  %s7 = inlined_call_operand.vmem [shape: f32[8,1], index: 7, kind: input, shape index: {}]
  %s8 = inlined_call_operand.vmem [shape: f32[8,72], index: 8, kind: input, shape index: {}]
  %s9 = inlined_call_operand.vmem [shape: f32[8,1], index: 9, kind: input, shape index: {}]
  %s10 = inlined_call_operand.vmem [shape: f32[8,72], index: 10, kind: input, shape index: {}]
  %s11 = inlined_call_operand.vmem [shape: f32[8,1], index: 11, kind: input, shape index: {}]
  %s12 = inlined_call_operand.vmem [shape: f32[8,72], index: 12, kind: input, shape index: {}]
  %s13 = inlined_call_operand.vmem [shape: f32[8,1], index: 13, kind: input, shape index: {}]
  %s14 = inlined_call_operand.vmem [shape: f32[2,8,256], index: 14, kind: output, shape index: {}]
  %s15 = sld [smem:[#allocation0]]
  $region89: #{refine_forward.1} parent=0
    _
  %s17 = ssub.s32 1, %s15
  %s18 = scalar_select 0, %s17, %s15
  loop: start=0, step=1, limit=4
  $region2: #{refine_forward.1} parent=0 // loop_pre_header
    _
  $region3: #{refine_forward.1} parent=0 // loop_header
    %s20 = sphi 0, %s24
    %p21 = scmp.ge.s32.totalorder %s20, 4
    %s30 = sphi 0, %s32
    %s33 = sphi 0, %s30
    %s34 = sphi 0, %s33
    %s50 = sphi 0, %s34
    %s56 = sphi 0, %s58
    %s59 = sphi 0, %s56
    %s60 = sphi 0, %s59
    %s76 = sphi 0, %s60
    %s80 = sphi 0, %s80
    %s82 = sphi 0, %s80
    %s83 = sphi 0, %s82
    %s97 = sphi 0, %s83
    %s101 = sphi 0, %s101
    %s103 = sphi 0, %s101
    %s104 = sphi 0, %s103
    %s118 = sphi 0, %s104
    %s122 = sphi 0, %s122
    %s124 = sphi 0, %s122
    %s125 = sphi 0, %s124
    %s139 = sphi 0, %s125
    %s143 = sphi 0, %s143
    %s145 = sphi 0, %s143
    %s146 = sphi 0, %s145
    %s160 = sphi 0, %s146
    %s164 = sphi 0, %s164
    %s166 = sphi 0, %s164
    %s167 = sphi 0, %s166
    %s181 = sphi 0, %s167
    %s185 = sphi 0, %s185
    %s187 = sphi 0, %s185
    %s188 = sphi 0, %s187
    %s202 = sphi 0, %s188
    %s206 = sphi 0, %s206
    %s208 = sphi 0, %s206
    %s209 = sphi 0, %s208
    %s223 = sphi 0, %s209
    %s227 = sphi 0, %s227
    %s229 = sphi 0, %s227
    %s230 = sphi 0, %s229
    %s244 = sphi 0, %s230
    %s248 = sphi 0, %s248
    %s250 = sphi 0, %s248
    %s251 = sphi 0, %s250
    %s265 = sphi 0, %s251
    %s269 = sphi 0, %s269
    %s271 = sphi 0, %s269
    %s272 = sphi 0, %s271
    %s286 = sphi 0, %s272
    %s290 = sphi 0, %s290
    %s292 = sphi 0, %s290
    %s293 = sphi 0, %s292
    %s307 = sphi 0, %s293
    %s311 = sphi 0, %s311
    %s313 = sphi 0, %s311
    %s314 = sphi 0, %s313
    %s328 = sphi 0, %s314
    %s334 = sphi 0, %s336
    %s337 = sphi 0, %s334
    %s338 = sphi 0, %s337
    %s354 = sphi 0, %s338
  $region4: #{refine_forward.1} parent=0 // loop_header_branch
    %23 = sbr.rel (%p21) target = $region8
  $region5: #{refine_forward.1} parent=0 // loop_body
    %s25 = ssub.s32 %s20, 1
    %s26 = ssub.s32 %s20, 2
    %s27 = sadd.s32 %s20, 1
    %s28 = ssub.s32 %s20, %s27
    %p29 = scmp.eq.s32.totalorder %s28, 0
    %s31 = sadd.s32 %s30, 1
    %s32 = scalar_select %p29, %s30, %s31
    %p35 = pneg %p29
    %p36 = scmp.eq.s32.totalorder %s20, 1
    %p37 = por %p35, %p36
    %p38 = scmp.ne.s32.totalorder %s30, %s33
    %p39 = scmp.eq.s32.totalorder %s20, 0
    %p40 = por %p38, %p39
    %p41 = scmp.ne.s32.totalorder %s30, %s33
    %p42 = scmp.eq.s32.totalorder %s25, 1
    %p43 = por %p41, %p42
    %p44 = scmp.ne.s32.totalorder %s33, %s34
    %p45 = scmp.eq.s32.totalorder %s25, 0
    %p46 = por %p44, %p45
    %p47 = scmp.ne.s32.totalorder %s33, %s34
    %p48 = scmp.eq.s32.totalorder %s26, 1
    %p49 = por %p47, %p48
    %p51 = scmp.ne.s32.totalorder %s34, %s50
    %p52 = scmp.eq.s32.totalorder %s26, 0
    %p53 = por %p51, %p52
    %s54 = ssub.s32 %s20, %s27
    %p55 = scmp.eq.s32.totalorder %s54, 0
    %s57 = sadd.s32 %s56, 1
    %s58 = scalar_select %p55, %s56, %s57
    %p61 = pneg %p55
    %p62 = scmp.eq.s32.totalorder %s20, 1
    %p63 = por %p61, %p62
    %p64 = scmp.ne.s32.totalorder %s56, %s59
    %p65 = scmp.eq.s32.totalorder %s20, 0
    %p66 = por %p64, %p65
    %p67 = scmp.ne.s32.totalorder %s56, %s59
    %p68 = scmp.eq.s32.totalorder %s25, 1
    %p69 = por %p67, %p68
    %p70 = scmp.ne.s32.totalorder %s59, %s60
    %p71 = scmp.eq.s32.totalorder %s25, 0
    %p72 = por %p70, %p71
    %p73 = scmp.ne.s32.totalorder %s59, %s60
    %p74 = scmp.eq.s32.totalorder %s26, 1
    %p75 = por %p73, %p74
    %p77 = scmp.ne.s32.totalorder %s60, %s76
    %p78 = scmp.eq.s32.totalorder %s26, 0
    %p79 = por %p77, %p78
    %s81 = sadd.s32 %s80, 1
    %p84 = scmp.eq.s32.totalorder %s20, 1
    %p85 = scmp.ne.s32.totalorder %s80, %s82
    %p86 = scmp.eq.s32.totalorder %s20, 0
    %p87 = por %p85, %p86
    %p88 = scmp.ne.s32.totalorder %s80, %s82
    %p89 = scmp.eq.s32.totalorder %s25, 1
    %p90 = por %p88, %p89
    %p91 = scmp.ne.s32.totalorder %s82, %s83
    %p92 = scmp.eq.s32.totalorder %s25, 0
    %p93 = por %p91, %p92
    %p94 = scmp.ne.s32.totalorder %s82, %s83
    %p95 = scmp.eq.s32.totalorder %s26, 1
    %p96 = por %p94, %p95
    %p98 = scmp.ne.s32.totalorder %s83, %s97
    %p99 = scmp.eq.s32.totalorder %s26, 0
    %p100 = por %p98, %p99
    %s102 = sadd.s32 %s101, 1
    %p105 = scmp.eq.s32.totalorder %s20, 1
    %p106 = scmp.ne.s32.totalorder %s101, %s103
    %p107 = scmp.eq.s32.totalorder %s20, 0
    %p108 = por %p106, %p107
    %p109 = scmp.ne.s32.totalorder %s101, %s103
    %p110 = scmp.eq.s32.totalorder %s25, 1
    %p111 = por %p109, %p110
    %p112 = scmp.ne.s32.totalorder %s103, %s104
    %p113 = scmp.eq.s32.totalorder %s25, 0
    %p114 = por %p112, %p113
    %p115 = scmp.ne.s32.totalorder %s103, %s104
    %p116 = scmp.eq.s32.totalorder %s26, 1
    %p117 = por %p115, %p116
    %p119 = scmp.ne.s32.totalorder %s104, %s118
    %p120 = scmp.eq.s32.totalorder %s26, 0
    %p121 = por %p119, %p120
    %s123 = sadd.s32 %s122, 1
    %p126 = scmp.eq.s32.totalorder %s20, 1
    %p127 = scmp.ne.s32.totalorder %s122, %s124
    %p128 = scmp.eq.s32.totalorder %s20, 0
    %p129 = por %p127, %p128
    %p130 = scmp.ne.s32.totalorder %s122, %s124
    %p131 = scmp.eq.s32.totalorder %s25, 1
    %p132 = por %p130, %p131
    %p133 = scmp.ne.s32.totalorder %s124, %s125
    %p134 = scmp.eq.s32.totalorder %s25, 0
    %p135 = por %p133, %p134
    %p136 = scmp.ne.s32.totalorder %s124, %s125
    %p137 = scmp.eq.s32.totalorder %s26, 1
    %p138 = por %p136, %p137
    %p140 = scmp.ne.s32.totalorder %s125, %s139
    %p141 = scmp.eq.s32.totalorder %s26, 0
    %p142 = por %p140, %p141
    %s144 = sadd.s32 %s143, 1
    %p147 = scmp.eq.s32.totalorder %s20, 1
    %p148 = scmp.ne.s32.totalorder %s143, %s145
    %p149 = scmp.eq.s32.totalorder %s20, 0
    %p150 = por %p148, %p149
    %p151 = scmp.ne.s32.totalorder %s143, %s145
    %p152 = scmp.eq.s32.totalorder %s25, 1
    %p153 = por %p151, %p152
    %p154 = scmp.ne.s32.totalorder %s145, %s146
    %p155 = scmp.eq.s32.totalorder %s25, 0
    %p156 = por %p154, %p155
    %p157 = scmp.ne.s32.totalorder %s145, %s146
    %p158 = scmp.eq.s32.totalorder %s26, 1
    %p159 = por %p157, %p158
    %p161 = scmp.ne.s32.totalorder %s146, %s160
    %p162 = scmp.eq.s32.totalorder %s26, 0
    %p163 = por %p161, %p162
    %s165 = sadd.s32 %s164, 1
    %p168 = scmp.eq.s32.totalorder %s20, 1
    %p169 = scmp.ne.s32.totalorder %s164, %s166
    %p170 = scmp.eq.s32.totalorder %s20, 0
    %p171 = por %p169, %p170
    %p172 = scmp.ne.s32.totalorder %s164, %s166
    %p173 = scmp.eq.s32.totalorder %s25, 1
    %p174 = por %p172, %p173
    %p175 = scmp.ne.s32.totalorder %s166, %s167
    %p176 = scmp.eq.s32.totalorder %s25, 0
    %p177 = por %p175, %p176
    %p178 = scmp.ne.s32.totalorder %s166, %s167
    %p179 = scmp.eq.s32.totalorder %s26, 1
    %p180 = por %p178, %p179
    %p182 = scmp.ne.s32.totalorder %s167, %s181
    %p183 = scmp.eq.s32.totalorder %s26, 0
    %p184 = por %p182, %p183
    %s186 = sadd.s32 %s185, 1
    %p189 = scmp.eq.s32.totalorder %s20, 1
    %p190 = scmp.ne.s32.totalorder %s185, %s187
    %p191 = scmp.eq.s32.totalorder %s20, 0
    %p192 = por %p190, %p191
    %p193 = scmp.ne.s32.totalorder %s185, %s187
    %p194 = scmp.eq.s32.totalorder %s25, 1
    %p195 = por %p193, %p194
    %p196 = scmp.ne.s32.totalorder %s187, %s188
    %p197 = scmp.eq.s32.totalorder %s25, 0
    %p198 = por %p196, %p197
    %p199 = scmp.ne.s32.totalorder %s187, %s188
    %p200 = scmp.eq.s32.totalorder %s26, 1
    %p201 = por %p199, %p200
    %p203 = scmp.ne.s32.totalorder %s188, %s202
    %p204 = scmp.eq.s32.totalorder %s26, 0
    %p205 = por %p203, %p204
    %s207 = sadd.s32 %s206, 1
    %p210 = scmp.eq.s32.totalorder %s20, 1
    %p211 = scmp.ne.s32.totalorder %s206, %s208
    %p212 = scmp.eq.s32.totalorder %s20, 0
    %p213 = por %p211, %p212
    %p214 = scmp.ne.s32.totalorder %s206, %s208
    %p215 = scmp.eq.s32.totalorder %s25, 1
    %p216 = por %p214, %p215
    %p217 = scmp.ne.s32.totalorder %s208, %s209
    %p218 = scmp.eq.s32.totalorder %s25, 0
    %p219 = por %p217, %p218
    %p220 = scmp.ne.s32.totalorder %s208, %s209
    %p221 = scmp.eq.s32.totalorder %s26, 1
    %p222 = por %p220, %p221
    %p224 = scmp.ne.s32.totalorder %s209, %s223
    %p225 = scmp.eq.s32.totalorder %s26, 0
    %p226 = por %p224, %p225
    %s228 = sadd.s32 %s227, 1
    %p231 = scmp.eq.s32.totalorder %s20, 1
    %p232 = scmp.ne.s32.totalorder %s227, %s229
    %p233 = scmp.eq.s32.totalorder %s20, 0
    %p234 = por %p232, %p233
    %p235 = scmp.ne.s32.totalorder %s227, %s229
    %p236 = scmp.eq.s32.totalorder %s25, 1
    %p237 = por %p235, %p236
    %p238 = scmp.ne.s32.totalorder %s229, %s230
    %p239 = scmp.eq.s32.totalorder %s25, 0
    %p240 = por %p238, %p239
    %p241 = scmp.ne.s32.totalorder %s229, %s230
    %p242 = scmp.eq.s32.totalorder %s26, 1
    %p243 = por %p241, %p242
    %p245 = scmp.ne.s32.totalorder %s230, %s244
    %p246 = scmp.eq.s32.totalorder %s26, 0
    %p247 = por %p245, %p246
    %s249 = sadd.s32 %s248, 1
    %p252 = scmp.eq.s32.totalorder %s20, 1
    %p253 = scmp.ne.s32.totalorder %s248, %s250
    %p254 = scmp.eq.s32.totalorder %s20, 0
    %p255 = por %p253, %p254
    %p256 = scmp.ne.s32.totalorder %s248, %s250
    %p257 = scmp.eq.s32.totalorder %s25, 1
    %p258 = por %p256, %p257
    %p259 = scmp.ne.s32.totalorder %s250, %s251
    %p260 = scmp.eq.s32.totalorder %s25, 0
    %p261 = por %p259, %p260
    %p262 = scmp.ne.s32.totalorder %s250, %s251
    %p263 = scmp.eq.s32.totalorder %s26, 1
    %p264 = por %p262, %p263
    %p266 = scmp.ne.s32.totalorder %s251, %s265
    %p267 = scmp.eq.s32.totalorder %s26, 0
    %p268 = por %p266, %p267
    %s270 = sadd.s32 %s269, 1
    %p273 = scmp.eq.s32.totalorder %s20, 1
    %p274 = scmp.ne.s32.totalorder %s269, %s271
    %p275 = scmp.eq.s32.totalorder %s20, 0
    %p276 = por %p274, %p275
    %p277 = scmp.ne.s32.totalorder %s269, %s271
    %p278 = scmp.eq.s32.totalorder %s25, 1
    %p279 = por %p277, %p278
    %p280 = scmp.ne.s32.totalorder %s271, %s272
    %p281 = scmp.eq.s32.totalorder %s25, 0
    %p282 = por %p280, %p281
    %p283 = scmp.ne.s32.totalorder %s271, %s272
    %p284 = scmp.eq.s32.totalorder %s26, 1
    %p285 = por %p283, %p284
    %p287 = scmp.ne.s32.totalorder %s272, %s286
    %p288 = scmp.eq.s32.totalorder %s26, 0
    %p289 = por %p287, %p288
    %s291 = sadd.s32 %s290, 1
    %p294 = scmp.eq.s32.totalorder %s20, 1
    %p295 = scmp.ne.s32.totalorder %s290, %s292
    %p296 = scmp.eq.s32.totalorder %s20, 0
    %p297 = por %p295, %p296
    %p298 = scmp.ne.s32.totalorder %s290, %s292
    %p299 = scmp.eq.s32.totalorder %s25, 1
    %p300 = por %p298, %p299
    %p301 = scmp.ne.s32.totalorder %s292, %s293
    %p302 = scmp.eq.s32.totalorder %s25, 0
    %p303 = por %p301, %p302
    %p304 = scmp.ne.s32.totalorder %s292, %s293
    %p305 = scmp.eq.s32.totalorder %s26, 1
    %p306 = por %p304, %p305
    %p308 = scmp.ne.s32.totalorder %s293, %s307
    %p309 = scmp.eq.s32.totalorder %s26, 0
    %p310 = por %p308, %p309
    %s312 = sadd.s32 %s311, 1
    %p315 = scmp.eq.s32.totalorder %s20, 1
    %p316 = scmp.ne.s32.totalorder %s311, %s313
    %p317 = scmp.eq.s32.totalorder %s20, 0
    %p318 = por %p316, %p317
    %p319 = scmp.ne.s32.totalorder %s311, %s313
    %p320 = scmp.eq.s32.totalorder %s25, 1
    %p321 = por %p319, %p320
    %p322 = scmp.ne.s32.totalorder %s313, %s314
    %p323 = scmp.eq.s32.totalorder %s25, 0
    %p324 = por %p322, %p323
    %p325 = scmp.ne.s32.totalorder %s313, %s314
    %p326 = scmp.eq.s32.totalorder %s26, 1
    %p327 = por %p325, %p326
    %p329 = scmp.ne.s32.totalorder %s314, %s328
    %p330 = scmp.eq.s32.totalorder %s26, 0
    %p331 = por %p329, %p330
    %s332 = ssub.s32 %s20, %s27
    %p333 = scmp.eq.s32.totalorder %s332, 0
    %s335 = sadd.s32 %s334, 1
    %s336 = scalar_select %p333, %s334, %s335
    %p339 = pneg %p333
    %p340 = scmp.eq.s32.totalorder %s20, 1
    %p341 = por %p339, %p340
    %p342 = scmp.ne.s32.totalorder %s334, %s337
    %p343 = scmp.eq.s32.totalorder %s20, 0
    %p344 = por %p342, %p343
    %p345 = scmp.ne.s32.totalorder %s334, %s337
    %p346 = scmp.eq.s32.totalorder %s25, 1
    %p347 = por %p345, %p346
    %p348 = scmp.ne.s32.totalorder %s337, %s338
    %p349 = scmp.eq.s32.totalorder %s25, 0
    %p350 = por %p348, %p349
    %p351 = scmp.ne.s32.totalorder %s337, %s338
    %p352 = scmp.eq.s32.totalorder %s26, 1
    %p353 = por %p351, %p352
    %p355 = scmp.ne.s32.totalorder %s338, %s354
    %p356 = scmp.eq.s32.totalorder %s26, 0
    %p357 = por %p355, %p356
    %p358 = scmp.le.s32.totalorder 1, %s20
    %p359 = scmp.lt.s32.totalorder %s20, 3
    %p360 = pnand %p358, %p359
    %p361 = pneg %p360
    // Predicated region
    $region9: #{refine_forward.1} parent=5 // pred_check
      _
    $region10: #{refine_forward.1} parent=5 // pred_check_branch
      %363 = sbr.rel (%p360) target = $region12
    $region11: #{refine_forward.1} parent=5 // pred_region
      %s364 = ssub.s32 %s20, 1
      // Predicated region
      $region13: #{refine_forward.1} parent=11 // pred_check
        %p365 = pneg %p93
      $region14: #{refine_forward.1} parent=11 // pred_check_branch
        %367 = sbr.rel (%p365) target = $region16
      $region15: #{refine_forward.1} parent=11 // pred_region
        _
      $region16: #{refine_forward.1} parent=11 // pred_fallthru
        _
      // Predicated region
      $region17: #{refine_forward.1} parent=11 // pred_check
        %p368 = pneg %p114
      $region18: #{refine_forward.1} parent=11 // pred_check_branch
        %370 = sbr.rel (%p368) target = $region20
      $region19: #{refine_forward.1} parent=11 // pred_region
        _
      $region20: #{refine_forward.1} parent=11 // pred_fallthru
        _
      // Predicated region
      $region21: #{refine_forward.1} parent=11 // pred_check
        %p371 = pneg %p135
      $region22: #{refine_forward.1} parent=11 // pred_check_branch
        %373 = sbr.rel (%p371) target = $region24
      $region23: #{refine_forward.1} parent=11 // pred_region
        _
      $region24: #{refine_forward.1} parent=11 // pred_fallthru
        _
      // Predicated region
      $region25: #{refine_forward.1} parent=11 // pred_check
        %p374 = pneg %p156
      $region26: #{refine_forward.1} parent=11 // pred_check_branch
        %376 = sbr.rel (%p374) target = $region28
      $region27: #{refine_forward.1} parent=11 // pred_region
        _
      $region28: #{refine_forward.1} parent=11 // pred_fallthru
        _
      // Predicated region
      $region29: #{refine_forward.1} parent=11 // pred_check
        %p377 = pneg %p177
      $region30: #{refine_forward.1} parent=11 // pred_check_branch
        %379 = sbr.rel (%p377) target = $region32
      $region31: #{refine_forward.1} parent=11 // pred_region
        _
      $region32: #{refine_forward.1} parent=11 // pred_fallthru
        _
      // Predicated region
      $region33: #{refine_forward.1} parent=11 // pred_check
        %p380 = pneg %p198
      $region34: #{refine_forward.1} parent=11 // pred_check_branch
        %382 = sbr.rel (%p380) target = $region36
      $region35: #{refine_forward.1} parent=11 // pred_region
        _
      $region36: #{refine_forward.1} parent=11 // pred_fallthru
        _
      // Predicated region
      $region37: #{refine_forward.1} parent=11 // pred_check
        %p383 = pneg %p219
      $region38: #{refine_forward.1} parent=11 // pred_check_branch
        %385 = sbr.rel (%p383) target = $region40
      $region39: #{refine_forward.1} parent=11 // pred_region
        _
      $region40: #{refine_forward.1} parent=11 // pred_fallthru
        _
      // Predicated region
      $region41: #{refine_forward.1} parent=11 // pred_check
        %p386 = pneg %p240
      $region42: #{refine_forward.1} parent=11 // pred_check_branch
        %388 = sbr.rel (%p386) target = $region44
      $region43: #{refine_forward.1} parent=11 // pred_region
        _
      $region44: #{refine_forward.1} parent=11 // pred_fallthru
        _
      // Predicated region
      $region45: #{refine_forward.1} parent=11 // pred_check
        %p389 = pneg %p261
      $region46: #{refine_forward.1} parent=11 // pred_check_branch
        %391 = sbr.rel (%p389) target = $region48
      $region47: #{refine_forward.1} parent=11 // pred_region
        _
      $region48: #{refine_forward.1} parent=11 // pred_fallthru
        _
      // Predicated region
      $region49: #{refine_forward.1} parent=11 // pred_check
        %p392 = pneg %p282
      $region50: #{refine_forward.1} parent=11 // pred_check_branch
        %394 = sbr.rel (%p392) target = $region52
      $region51: #{refine_forward.1} parent=11 // pred_region
        _
      $region52: #{refine_forward.1} parent=11 // pred_fallthru
        _
      // Predicated region
      $region53: #{refine_forward.1} parent=11 // pred_check
        %p395 = pneg %p303
      $region54: #{refine_forward.1} parent=11 // pred_check_branch
        %397 = sbr.rel (%p395) target = $region56
      $region55: #{refine_forward.1} parent=11 // pred_region
        _
      $region56: #{refine_forward.1} parent=11 // pred_fallthru
        _
      // Predicated region
      $region57: #{refine_forward.1} parent=11 // pred_check
        %p398 = pneg %p324
      $region58: #{refine_forward.1} parent=11 // pred_check_branch
        %400 = sbr.rel (%p398) target = $region60
      $region59: #{refine_forward.1} parent=11 // pred_region
        _
      $region60: #{refine_forward.1} parent=11 // pred_fallthru
        _
    $region12: #{refine_forward.1} parent=5 // pred_fallthru
      _
    %p401 = scmp.lt.s32.totalorder %s20, 2
    // Predicated region
    $region61: #{refine_forward.1} parent=5 // pred_check
      %p402 = pneg %p401
    $region62: #{refine_forward.1} parent=5 // pred_check_branch
      %404 = sbr.rel (%p402) target = $region64
    $region63: #{refine_forward.1} parent=5 // pred_region
      // Predicated region
      $region65: #{refine_forward.1} parent=63 // pred_check
        %p405 = pneg %p40
      $region66: #{refine_forward.1} parent=63 // pred_check_branch
        %407 = sbr.rel (%p405) target = $region68
      $region67: #{refine_forward.1} parent=63 // pred_region
        %p408 = scmp.lt.s32.totalorder %s20, 1
        %s409 = scalar_select %p408, %s20, 1
        %s410 = smul.addr %s409, 4
        %s411 = smul.addr %s410, 8
        %s412 = scalar_lea.vmem %s0, %s411
      $region68: #{refine_forward.1} parent=63 // pred_fallthru
        _
      // Predicated region
      $region69: #{refine_forward.1} parent=63 // pred_check
        %p413 = pneg %p66
      $region70: #{refine_forward.1} parent=63 // pred_check_branch
        %415 = sbr.rel (%p413) target = $region72
      $region71: #{refine_forward.1} parent=63 // pred_region
        %p416 = scmp.lt.s32.totalorder %s20, 1
        %s417 = scalar_select %p416, %s20, 1
        %s418 = smul.addr %s417, 8
        %s419 = scalar_lea.vmem %s1, %s418
      $region72: #{refine_forward.1} parent=63 // pred_fallthru
        _
    $region64: #{refine_forward.1} parent=5 // pred_fallthru
      _
    %p420 = scmp.le.s32.totalorder 1, %s20
    %p421 = scmp.lt.s32.totalorder %s20, 3
    %p422 = pnand %p420, %p421
    %p423 = pneg %p422
    // Predicated region
    $region73: #{refine_forward.1} parent=5 // pred_check
      _
    $region74: #{refine_forward.1} parent=5 // pred_check_branch
      %425 = sbr.rel (%p422) target = $region76
    $region75: #{refine_forward.1} parent=5 // pred_region
      %s426 = ssub.s32 %s20, 1
      %p427 = scmp.lt.s32.totalorder %s25, 1
      %s428 = scalar_select %p427, %s25, 1
      %s429 = smul.addr %s428, 4
      %s430 = smul.addr %s429, 8
      %s431 = scalar_lea.vmem %s0, %s430
      %p432 = pneg %p46
      %p433 = pneg %p43
      %p434 = scmp.lt.s32.totalorder %s25, 1
      %s435 = scalar_select %p434, %s25, 1
      %s436 = smul.addr %s435, 8
      %s437 = scalar_lea.vmem %s1, %s436
      %p438 = pneg %p72
      %p439 = pneg %p69
      %p440 = pneg %p93
      %p441 = pneg %p90
      %p442 = pneg %p114
      %p443 = pneg %p111
      %p444 = pneg %p135
      %p445 = pneg %p132
      %p446 = pneg %p156
      %p447 = pneg %p153
      %p448 = pneg %p177
      %p449 = pneg %p174
      %p450 = pneg %p198
      %p451 = pneg %p195
      %p452 = pneg %p219
      %p453 = pneg %p216
      %p454 = pneg %p240
      %p455 = pneg %p237
      %p456 = pneg %p261
      %p457 = pneg %p258
      %p458 = pneg %p282
      %p459 = pneg %p279
      %p460 = pneg %p303
      %p461 = pneg %p300
      %p462 = pneg %p324
      %p463 = pneg %p321
      %p464 = pneg %p350
      %p465 = pneg %p347
      %p466 = scmp.lt.s32.totalorder %s25, 1
      %s467 = scalar_select %p466, %s25, 1
      %s468 = smul.addr %s467, 2
      %s469 = smul.addr %s468, 8
      %s470 = scalar_lea.vmem %s14, %s469
      %p471 = scmp.lt.s32.totalorder %s25, 1
      %s472 = scalar_select %p471, %s25, 1
      %s473 = smul.addr %s472, 4
      %s474 = smul.addr %s473, 8
      %s475 = scalar_lea.vmem %s0, %s474
      %p476 = scmp.lt.s32.totalorder %s25, 1
      %s477 = scalar_select %p476, %s25, 1
      %s478 = smul.addr %s477, 8
      %s479 = scalar_lea.vmem %s1, %s478
      %p480 = scmp.lt.s32.totalorder %s25, 1
      %s481 = scalar_select %p480, %s25, 1
      %s482 = smul.addr %s481, 2
      %s483 = smul.addr %s482, 8
      %s484 = scalar_lea.vmem %s14, %s483
      %v485 = vld [vmem:[%s2] sm:$0xff]
      %v486 = vld [vmem:[%s2 + $0x8] sm:$0xff]
      %v487 = vld [vmem:[%s2 + $0x10] sm:$0x1]
      %v488 = vld [vmem:[%s2 + $0x18] sm:$0x1]
      %v489 = vld [vmem:[%s475] sm:$0xff]
      %v490 = vld [vmem:[%s475 + $0x8] sm:$0xff]
      %v491 = vld [vmem:[%s475 + $0x10] sm:$0xff]
      %v492 = vld [vmem:[%s475 + $0x18] sm:$0xff]
      %493 = vrot.lane.b32.xlu0 %v489, 17
      %v494 = vpop.permute.xlu0 %493
      %495 = vrot.lane.b32.xlu0 %v491, 17
      %v496 = vpop.permute.xlu0 %495
      %497 = vrot.lane.b32.xlu0 %v490, 17
      %v498 = vpop.permute.xlu0 %497
      %499 = vrot.lane.b32.xlu0 %v492, 17
      %v500 = vpop.permute.xlu0 %499
      %v501 = vlaneseq
      %v502 = vand.u32 %v501, 127
      %vm503 = vcmp.lt.s32.totalorder %v502, 17
      %v504 = vsel %vm503, %v494, %v498
      %v505 = vsel %vm503, %v496, %v500
      %v506 = vsel %vm503, %v498, %v494
      %v507 = vsel %vm503, %v500, %v496
      %v508 = vlaneseq
      %v509 = vshrl.u32 %v508, 7
      %v510 = vsub.s32 0, %v509
      %v511 = vrot.slane %v485, %v510
      %v512 = vlaneseq
      %v513 = vshrl.u32 %v512, 7
      %v514 = vsub.s32 0, %v513
      %v515 = vrot.slane %v486, %v514
      %v516 = vmul.f32 %v506, %v511
      %v517 = vmul.f32 %v504, %v515
      %v518 = vmul.f32 %v507, %v511
      %v519 = vmul.f32 %v505, %v515
      %520 = vst [vmem:[#allocation2] sm:$0xff] %v516
      %521 = vst [vmem:[#allocation2 + $0x8] sm:$0xff] %v517
      %522 = vst [vmem:[#allocation2 + $0x10] sm:$0xff] %v518
      %523 = vst [vmem:[#allocation2 + $0x18] sm:$0xff] %v519
      %524 = vrot.lane.b32.xlu0 %v489, 16
      %v525 = vpop.permute.xlu0 %524
      %526 = vrot.lane.b32.xlu0 %v491, 16
      %v527 = vpop.permute.xlu0 %526
      %528 = vrot.lane.b32.xlu0 %v490, 16
      %v529 = vpop.permute.xlu0 %528
      %530 = vrot.lane.b32.xlu0 %v492, 16
      %v531 = vpop.permute.xlu0 %530
      %vm532 = vcmp.lt.s32.totalorder %v502, 16
      %v533 = vsel %vm532, %v525, %v529
      %v534 = vsel %vm532, %v527, %v531
      %v535 = vsel %vm532, %v529, %v525
      %v536 = vsel %vm532, %v531, %v527
      %v537 = vlaneseq
      %v538 = vshrl.u32 %v537, 7
      %v539 = vsub.s32 1, %v538
      %v540 = vrot.slane %v485, %v539
      %v541 = vlaneseq
      %v542 = vshrl.u32 %v541, 7
      %v543 = vsub.s32 1, %v542
      %v544 = vrot.slane %v486, %v543
      %v545 = vmul.f32 %v535, %v540
      %v546 = vmul.f32 %v533, %v544
      %v547 = vmul.f32 %v536, %v540
      %v548 = vmul.f32 %v534, %v544
      %549 = vst [vmem:[#allocation2 + $0x20] sm:$0xff] %v545
      %550 = vst [vmem:[#allocation2 + $0x28] sm:$0xff] %v546
      %551 = vst [vmem:[#allocation2 + $0x30] sm:$0xff] %v547
      %552 = vst [vmem:[#allocation2 + $0x38] sm:$0xff] %v548
      %553 = vrot.lane.b32.xlu0 %v489, 15
      %v554 = vpop.permute.xlu0 %553
      %555 = vrot.lane.b32.xlu0 %v491, 15
      %v556 = vpop.permute.xlu0 %555
      %557 = vrot.lane.b32.xlu0 %v490, 15
      %v558 = vpop.permute.xlu0 %557
      %559 = vrot.lane.b32.xlu0 %v492, 15
      %v560 = vpop.permute.xlu0 %559
      %vm561 = vcmp.lt.s32.totalorder %v502, 15
      %v562 = vsel %vm561, %v554, %v558
      %v563 = vsel %vm561, %v556, %v560
      %v564 = vsel %vm561, %v558, %v554
      %v565 = vsel %vm561, %v560, %v556
      %v566 = vlaneseq
      %v567 = vshrl.u32 %v566, 7
      %v568 = vsub.s32 2, %v567
      %v569 = vrot.slane %v485, %v568
      %v570 = vlaneseq
      %v571 = vshrl.u32 %v570, 7
      %v572 = vsub.s32 2, %v571
      %v573 = vrot.slane %v486, %v572
      %v574 = vmul.f32 %v564, %v569
      %v575 = vmul.f32 %v562, %v573
      %v576 = vmul.f32 %v565, %v569
      %v577 = vmul.f32 %v563, %v573
      %578 = vst [vmem:[#allocation2 + $0x40] sm:$0xff] %v574
      %579 = vst [vmem:[#allocation2 + $0x48] sm:$0xff] %v575
      %580 = vst [vmem:[#allocation2 + $0x50] sm:$0xff] %v576
      %581 = vst [vmem:[#allocation2 + $0x58] sm:$0xff] %v577
      %582 = vrot.lane.b32.xlu0 %v489, 1
      %v583 = vpop.permute.xlu0 %582
      %584 = vrot.lane.b32.xlu0 %v491, 1
      %v585 = vpop.permute.xlu0 %584
      %586 = vrot.lane.b32.xlu0 %v490, 1
      %v587 = vpop.permute.xlu0 %586
      %588 = vrot.lane.b32.xlu0 %v492, 1
      %v589 = vpop.permute.xlu0 %588
      %vm590 = vcmp.lt.s32.totalorder %v502, 1
      %v591 = vsel %vm590, %v583, %v587
      %v592 = vsel %vm590, %v585, %v589
      %v593 = vsel %vm590, %v587, %v583
      %v594 = vsel %vm590, %v589, %v585
      %v595 = vlaneseq
      %v596 = vshrl.u32 %v595, 7
      %v597 = vsub.s32 3, %v596
      %v598 = vrot.slane %v485, %v597
      %v599 = vlaneseq
      %v600 = vshrl.u32 %v599, 7
      %v601 = vsub.s32 3, %v600
      %v602 = vrot.slane %v486, %v601
      %v603 = vmul.f32 %v593, %v598
      %v604 = vmul.f32 %v591, %v602
      %v605 = vmul.f32 %v594, %v598
      %v606 = vmul.f32 %v592, %v602
      %607 = vst [vmem:[#allocation2 + $0x60] sm:$0xff] %v603
      %608 = vst [vmem:[#allocation2 + $0x68] sm:$0xff] %v604
      %609 = vst [vmem:[#allocation2 + $0x70] sm:$0xff] %v605
      %610 = vst [vmem:[#allocation2 + $0x78] sm:$0xff] %v606
      %611 = vst [vmem:[#allocation2 + $0x80] sm:$0xff] %v489
      %612 = vst [vmem:[#allocation2 + $0x88] sm:$0xff] %v490
      %613 = vst [vmem:[#allocation2 + $0x90] sm:$0xff] %v491
      %614 = vst [vmem:[#allocation2 + $0x98] sm:$0xff] %v492
      %615 = vrot.lane.b32.xlu0 %v489, 127
      %v616 = vpop.permute.xlu0 %615
      %617 = vrot.lane.b32.xlu0 %v491, 127
      %v618 = vpop.permute.xlu0 %617
      %619 = vrot.lane.b32.xlu0 %v490, 127
      %v620 = vpop.permute.xlu0 %619
      %621 = vrot.lane.b32.xlu0 %v492, 127
      %v622 = vpop.permute.xlu0 %621
      %vm623 = vcmp.lt.s32.totalorder %v502, 127
      %v624 = vsel %vm623, %v616, %v620
      %v625 = vsel %vm623, %v618, %v622
      %v626 = vsel %vm623, %v620, %v616
      %v627 = vsel %vm623, %v622, %v618
      %v628 = vlaneseq
      %v629 = vshrl.u32 %v628, 7
      %v630 = vsub.s32 5, %v629
      %v631 = vrot.slane %v485, %v630
      %v632 = vlaneseq
      %v633 = vshrl.u32 %v632, 7
      %v634 = vsub.s32 5, %v633
      %v635 = vrot.slane %v486, %v634
      %v636 = vmul.f32 %v624, %v631
      %v637 = vmul.f32 %v626, %v635
      %v638 = vmul.f32 %v625, %v631
      %v639 = vmul.f32 %v627, %v635
      %640 = vst [vmem:[#allocation2 + $0xa0] sm:$0xff] %v636
      %641 = vst [vmem:[#allocation2 + $0xa8] sm:$0xff] %v637
      %642 = vst [vmem:[#allocation2 + $0xb0] sm:$0xff] %v638
      %643 = vst [vmem:[#allocation2 + $0xb8] sm:$0xff] %v639
      %644 = vrot.lane.b32.xlu0 %v489, 113
      %v645 = vpop.permute.xlu0 %644
      %646 = vrot.lane.b32.xlu0 %v491, 113
      %v647 = vpop.permute.xlu0 %646
      %648 = vrot.lane.b32.xlu0 %v490, 113
      %v649 = vpop.permute.xlu0 %648
      %650 = vrot.lane.b32.xlu0 %v492, 113
      %v651 = vpop.permute.xlu0 %650
      %vm652 = vcmp.lt.s32.totalorder %v502, 113
      %v653 = vsel %vm652, %v645, %v649
      %v654 = vsel %vm652, %v647, %v651
      %v655 = vsel %vm652, %v649, %v645
      %v656 = vsel %vm652, %v651, %v647
      %v657 = vlaneseq
      %v658 = vshrl.u32 %v657, 7
      %v659 = vsub.s32 6, %v658
      %v660 = vrot.slane %v485, %v659
      %v661 = vlaneseq
      %v662 = vshrl.u32 %v661, 7
      %v663 = vsub.s32 6, %v662
      %v664 = vrot.slane %v486, %v663
      %v665 = vmul.f32 %v653, %v660
      %v666 = vmul.f32 %v655, %v664
      %v667 = vmul.f32 %v654, %v660
      %v668 = vmul.f32 %v656, %v664
      %669 = vst [vmem:[#allocation2 + $0xc0] sm:$0xff] %v665
      %670 = vst [vmem:[#allocation2 + $0xc8] sm:$0xff] %v666
      %671 = vst [vmem:[#allocation2 + $0xd0] sm:$0xff] %v667
      %672 = vst [vmem:[#allocation2 + $0xd8] sm:$0xff] %v668
      %673 = vrot.lane.b32.xlu0 %v489, 112
      %v674 = vpop.permute.xlu0 %673
      %675 = vrot.lane.b32.xlu0 %v491, 112
      %v676 = vpop.permute.xlu0 %675
      %677 = vrot.lane.b32.xlu0 %v490, 112
      %v678 = vpop.permute.xlu0 %677
      %679 = vrot.lane.b32.xlu0 %v492, 112
      %v680 = vpop.permute.xlu0 %679
      %vm681 = vcmp.lt.s32.totalorder %v502, 112
      %v682 = vsel %vm681, %v674, %v678
      %v683 = vsel %vm681, %v676, %v680
      %v684 = vsel %vm681, %v678, %v674
      %v685 = vsel %vm681, %v680, %v676
      %v686 = vlaneseq
      %v687 = vshrl.u32 %v686, 7
      %v688 = vsub.s32 7, %v687
      %v689 = vrot.slane %v485, %v688
      %v690 = vlaneseq
      %v691 = vshrl.u32 %v690, 7
      %v692 = vsub.s32 7, %v691
      %v693 = vrot.slane %v486, %v692
      %v694 = vmul.f32 %v682, %v689
      %v695 = vmul.f32 %v684, %v693
      %v696 = vmul.f32 %v683, %v689
      %v697 = vmul.f32 %v685, %v693
      %698 = vst [vmem:[#allocation2 + $0xe0] sm:$0xff] %v694
      %699 = vst [vmem:[#allocation2 + $0xe8] sm:$0xff] %v695
      %700 = vst [vmem:[#allocation2 + $0xf0] sm:$0xff] %v696
      %701 = vst [vmem:[#allocation2 + $0xf8] sm:$0xff] %v697
      %702 = vrot.lane.b32.xlu0 %v489, 111
      %v703 = vpop.permute.xlu0 %702
      %704 = vrot.lane.b32.xlu0 %v491, 111
      %v705 = vpop.permute.xlu0 %704
      %706 = vrot.lane.b32.xlu0 %v490, 111
      %v707 = vpop.permute.xlu0 %706
      %708 = vrot.lane.b32.xlu0 %v492, 111
      %v709 = vpop.permute.xlu0 %708
      %vm710 = vcmp.lt.s32.totalorder %v502, 111
      %v711 = vsel %vm710, %v703, %v707
      %v712 = vsel %vm710, %v705, %v709
      %v713 = vsel %vm710, %v707, %v703
      %v714 = vsel %vm710, %v709, %v705
      %v715 = vlaneseq
      %v716 = vshrl.u32 %v715, 7
      %v717 = vsub.s32 0, %v716
      %v718 = vrot.slane %v487, %v717
      %v719 = vlaneseq
      %v720 = vshrl.u32 %v719, 7
      %v721 = vsub.s32 0, %v720
      %v722 = vrot.slane %v488, %v721
      %v723 = vmul.f32 %v711, %v718
      %v724 = vmul.f32 %v713, %v722
      %v725 = vmul.f32 %v712, %v718
      %v726 = vmul.f32 %v714, %v722
      %727 = vst [vmem:[#allocation2 + $0x100] sm:$0xff] %v723
      %728 = vst [vmem:[#allocation2 + $0x108] sm:$0xff] %v724
      %729 = vst [vmem:[#allocation2 + $0x110] sm:$0xff] %v725
      %730 = vst [vmem:[#allocation2 + $0x118] sm:$0xff] %v726
      %v731 = vld [vmem:[#allocation2] sm:$0xff]
      %v732 = vld [vmem:[#allocation2 + $0x8] sm:$0xff]
      %v733 = vld [vmem:[#allocation2 + $0x10] sm:$0xff]
      %v734 = vld [vmem:[#allocation2 + $0x18] sm:$0xff]
      %v735 = vld [vmem:[#allocation2 + $0x20] sm:$0xff]
      %v736 = vld [vmem:[#allocation2 + $0x28] sm:$0xff]
      %v737 = vld [vmem:[#allocation2 + $0x30] sm:$0xff]
      %v738 = vld [vmem:[#allocation2 + $0x38] sm:$0xff]
      %v739 = vld [vmem:[#allocation2 + $0x40] sm:$0xff]
      %v740 = vld [vmem:[#allocation2 + $0x48] sm:$0xff]
      %v741 = vld [vmem:[#allocation2 + $0x50] sm:$0xff]
      %v742 = vld [vmem:[#allocation2 + $0x58] sm:$0xff]
      %v743 = vld [vmem:[#allocation2 + $0x60] sm:$0xff]
      %v744 = vld [vmem:[#allocation2 + $0x68] sm:$0xff]
      %v745 = vld [vmem:[#allocation2 + $0x70] sm:$0xff]
      %v746 = vld [vmem:[#allocation2 + $0x78] sm:$0xff]
      %v747 = vld [vmem:[#allocation2 + $0x80] sm:$0xff]
      %v748 = vld [vmem:[#allocation2 + $0x88] sm:$0xff]
      %v749 = vld [vmem:[#allocation2 + $0x90] sm:$0xff]
      %v750 = vld [vmem:[#allocation2 + $0x98] sm:$0xff]
      %v751 = vld [vmem:[#allocation2 + $0xa0] sm:$0xff]
      %v752 = vld [vmem:[#allocation2 + $0xa8] sm:$0xff]
      %v753 = vld [vmem:[#allocation2 + $0xb0] sm:$0xff]
      %v754 = vld [vmem:[#allocation2 + $0xb8] sm:$0xff]
      %v755 = vld [vmem:[#allocation2 + $0xc0] sm:$0xff]
      %v756 = vld [vmem:[#allocation2 + $0xc8] sm:$0xff]
      %v757 = vld [vmem:[#allocation2 + $0xd0] sm:$0xff]
      %v758 = vld [vmem:[#allocation2 + $0xd8] sm:$0xff]
      %v759 = vld [vmem:[#allocation2 + $0xe0] sm:$0xff]
      %v760 = vld [vmem:[#allocation2 + $0xe8] sm:$0xff]
      %v761 = vld [vmem:[#allocation2 + $0xf0] sm:$0xff]
      %v762 = vld [vmem:[#allocation2 + $0xf8] sm:$0xff]
      %v763 = vld [vmem:[#allocation2 + $0x100] sm:$0xff]
      %v764 = vld [vmem:[#allocation2 + $0x108] sm:$0xff]
      %v765 = vld [vmem:[#allocation2 + $0x110] sm:$0xff]
      %v766 = vld [vmem:[#allocation2 + $0x118] sm:$0xff]
      %v767 = vld [vmem:[%s4] sm:$0xff]
      %v768 = vld [vmem:[%s4 + $0x8] sm:$0xff]
      %v769 = vld [vmem:[%s5] sm:$0xff]
      %771 = vset.pattern.permute.xlu0 0
      %772 = vperm.xlu0 %771, %v769
      %v773 = vpop.permute.xlu0 %772
      %vm775 = vcmask 130048
      %v777 = vsel %vm775, %v768, 0
      %779 = vmatprep.subr.mxu0 %v732
      %780 = vmatpush1.msra.mxu0 %v731
      %781 = vmatprep.subr.mxu0 %v734
      %782 = vmatpush1.msra.mxu0 %v733
      %783 = vmatprep.subr.mxu0 %v736
      %784 = vmatpush1.msra.mxu0 %v735
      %785 = vmatprep.subr.mxu0 %v738
      %786 = vmatpush1.msra.mxu0 %v737
      %787 = vmatprep.subr.mxu0 %v740
      %788 = vmatpush1.msra.mxu0 %v739
      %789 = vmatprep.subr.mxu0 %v742
      %790 = vmatpush1.msra.mxu0 %v741
      %791 = vmatprep.subr.mxu0 %v744
      %792 = vmatpush1.msra.mxu0 %v743
      %793 = vmatprep.subr.mxu0 %v746
      %794 = vmatpush1.msra.mxu0 %v745
      %795 = vmatprep.subr.mxu0 %v748
      %796 = vmatpush1.msra.mxu0 %v747
      %797 = vmatprep.subr.mxu0 %v750
      %798 = vmatpush1.msra.mxu0 %v749
      %799 = vmatprep.subr.mxu0 %v752
      %800 = vmatpush1.msra.mxu0 %v751
      %801 = vmatprep.subr.mxu0 %v754
      %802 = vmatpush1.msra.mxu0 %v753
      %803 = vmatprep.subr.mxu0 %v756
      %804 = vmatpush1.msra.mxu0 %v755
      %805 = vmatprep.subr.mxu0 %v758
      %806 = vmatpush1.msra.mxu0 %v757
      %807 = vmatprep.subr.mxu0 %v760
      %808 = vmatpush1.msra.mxu0 %v759
      %809 = vmatprep.subr.mxu0 %v762
      %810 = vmatpush1.msra.mxu0 %v761
      %811 = vmatprep.subr.mxu0 %v764
      %812 = vmatpush1.msra.mxu0 %v763
      %813 = vmatprep.subr.mxu0 %v766
      %814 = vmatpush1.msra.mxu0 %v765
      %815 = vmatprep.subr.mxu0 0.0
      %816 = vmatpush1.msra.mxu0 0.0
      %817 = vmatprep.subr.mxu0 0.0
      %818 = vmatpush1.msra.mxu0 0.0
      %819 = vmatprep.subr.mxu0 0.0
      %820 = vmatpush1.msra.mxu0 0.0
      %821 = vmatprep.subr.mxu0 0.0
      %822 = vmatpush1.msra.mxu0 0.0
      %823 = vmatprep.subr.mxu0 0.0
      %824 = vmatpush1.msra.mxu0 0.0
      %825 = vmatprep.subr.mxu0 0.0
      %826 = vmatpush1.msra.mxu0 0.0
      %827 = vmatprep.subr.mxu0 0.0
      %828 = vmatpush1.msra.mxu0 0.0
      %829 = vmatprep.subr.mxu0 0.0
      %830 = vmatpush1.msra.mxu0 0.0
      %831 = vmatprep.subr.mxu0 0.0
      %832 = vmatpush1.msra.mxu0 0.0
      %833 = vmatprep.subr.mxu0 0.0
      %834 = vmatpush1.msra.mxu0 0.0
      %835 = vmatprep.subr.mxu0 0.0
      %836 = vmatpush1.msra.mxu0 0.0
      %837 = vmatprep.subr.mxu0 0.0
      %838 = vmatpush1.msra.mxu0 0.0
      %839 = vmatprep.subr.mxu0 0.0
      %840 = vmatpush1.msra.mxu0 0.0
      %841 = vmatprep.subr.mxu0 0.0
      %842 = vmatpush1.msra.mxu0 0.0
      %843 = vmatprep.mubr.f32.mxu0 %v777
      %844 = vmatmul.mubr.f32.gmra.mrb[0].mxu0 %v767
      %v845 = vpop.f32.mrb[0].mxu0
      %v846 = vadd.f32 %v773, %v845
      %v847 = vpop.f32.mrb[0].mxu0
      %v848 = vadd.f32 %v773, %v847
      %849 = vdwg.mxu0
      %v850 = vmax.f32 %v846, 0.0
      %v851 = vmax.f32 %v848, 0.0
      %852 = vrot.lane.b32.xlu0 %v850, 17
      %v853 = vpop.permute.xlu0 %852
      %854 = vrot.lane.b32.xlu0 %v851, 17
      %v855 = vpop.permute.xlu0 %854
      %v856 = vsel %vm503, %v853, %v855
      %v857 = vsel %vm503, %v855, %v853
      %v858 = vmul.f32 %v857, %v511
      %v859 = vmul.f32 %v856, %v515
      %860 = vst [vmem:[#allocation2] sm:$0xff] %v858
      %861 = vst [vmem:[#allocation2 + $0x8] sm:$0xff] %v859
      %862 = vrot.lane.b32.xlu0 %v850, 16
      %v863 = vpop.permute.xlu0 %862
      %864 = vrot.lane.b32.xlu0 %v851, 16
      %v865 = vpop.permute.xlu0 %864
      %v866 = vsel %vm532, %v863, %v865
      %v867 = vsel %vm532, %v865, %v863
      %v868 = vmul.f32 %v867, %v540
      %v869 = vmul.f32 %v866, %v544
      %870 = vst [vmem:[#allocation2 + $0x10] sm:$0xff] %v868
      %871 = vst [vmem:[#allocation2 + $0x18] sm:$0xff] %v869
      %872 = vrot.lane.b32.xlu0 %v850, 15
      %v873 = vpop.permute.xlu0 %872
      %874 = vrot.lane.b32.xlu0 %v851, 15
      %v875 = vpop.permute.xlu0 %874
      %v876 = vsel %vm561, %v873, %v875
      %v877 = vsel %vm561, %v875, %v873
      %v878 = vmul.f32 %v877, %v569
      %v879 = vmul.f32 %v876, %v573
      %880 = vst [vmem:[#allocation2 + $0x20] sm:$0xff] %v878
      %881 = vst [vmem:[#allocation2 + $0x28] sm:$0xff] %v879
      %882 = vrot.lane.b32.xlu0 %v850, 1
      %v883 = vpop.permute.xlu0 %882
      %884 = vrot.lane.b32.xlu0 %v851, 1
      %v885 = vpop.permute.xlu0 %884
      %v886 = vsel %vm590, %v883, %v885
      %v887 = vsel %vm590, %v885, %v883
      %v888 = vmul.f32 %v887, %v598
      %v889 = vmul.f32 %v886, %v602
      %890 = vst [vmem:[#allocation2 + $0x30] sm:$0xff] %v888
      %891 = vst [vmem:[#allocation2 + $0x38] sm:$0xff] %v889
      %892 = vst [vmem:[#allocation2 + $0x40] sm:$0xff] %v850
      %893 = vst [vmem:[#allocation2 + $0x48] sm:$0xff] %v851
      %894 = vrot.lane.b32.xlu0 %v850, 127
      %v895 = vpop.permute.xlu0 %894
      %896 = vrot.lane.b32.xlu0 %v851, 127
      %v897 = vpop.permute.xlu0 %896
      %v898 = vsel %vm623, %v895, %v897
      %v899 = vsel %vm623, %v897, %v895
      %v900 = vmul.f32 %v898, %v631
      %v901 = vmul.f32 %v899, %v635
      %902 = vst [vmem:[#allocation2 + $0x50] sm:$0xff] %v900
      %903 = vst [vmem:[#allocation2 + $0x58] sm:$0xff] %v901
      %904 = vrot.lane.b32.xlu0 %v850, 113
      %v905 = vpop.permute.xlu0 %904
      %906 = vrot.lane.b32.xlu0 %v851, 113
      %v907 = vpop.permute.xlu0 %906
      %v908 = vsel %vm652, %v905, %v907
      %v909 = vsel %vm652, %v907, %v905
      %v910 = vmul.f32 %v908, %v660
      %v911 = vmul.f32 %v909, %v664
      %912 = vst [vmem:[#allocation2 + $0x60] sm:$0xff] %v910
      %913 = vst [vmem:[#allocation2 + $0x68] sm:$0xff] %v911
      %914 = vrot.lane.b32.xlu0 %v850, 112
      %v915 = vpop.permute.xlu0 %914
      %916 = vrot.lane.b32.xlu0 %v851, 112
      %v917 = vpop.permute.xlu0 %916
      %v918 = vsel %vm681, %v915, %v917
      %v919 = vsel %vm681, %v917, %v915
      %v920 = vmul.f32 %v918, %v689
      %v921 = vmul.f32 %v919, %v693
      %922 = vst [vmem:[#allocation2 + $0x70] sm:$0xff] %v920
      %923 = vst [vmem:[#allocation2 + $0x78] sm:$0xff] %v921
      %924 = vrot.lane.b32.xlu0 %v850, 111
      %v925 = vpop.permute.xlu0 %924
      %926 = vrot.lane.b32.xlu0 %v851, 111
      %v927 = vpop.permute.xlu0 %926
      %v928 = vsel %vm710, %v925, %v927
      %v929 = vsel %vm710, %v927, %v925
      %v930 = vmul.f32 %v928, %v718
      %v931 = vmul.f32 %v929, %v722
      %932 = vst [vmem:[#allocation2 + $0x80] sm:$0xff] %v930
      %933 = vst [vmem:[#allocation2 + $0x88] sm:$0xff] %v931
      %v934 = vld [vmem:[#allocation2] sm:$0xff]
      %v935 = vld [vmem:[#allocation2 + $0x8] sm:$0xff]
      %v936 = vld [vmem:[#allocation2 + $0x10] sm:$0xff]
      %v937 = vld [vmem:[#allocation2 + $0x18] sm:$0xff]
      %v938 = vld [vmem:[#allocation2 + $0x20] sm:$0xff]
      %v939 = vld [vmem:[#allocation2 + $0x28] sm:$0xff]
      %v940 = vld [vmem:[#allocation2 + $0x30] sm:$0xff]
      %v941 = vld [vmem:[#allocation2 + $0x38] sm:$0xff]
      %v942 = vld [vmem:[#allocation2 + $0x40] sm:$0xff]
      %v943 = vld [vmem:[#allocation2 + $0x48] sm:$0xff]
      %v944 = vld [vmem:[#allocation2 + $0x50] sm:$0xff]
      %v945 = vld [vmem:[#allocation2 + $0x58] sm:$0xff]
      %v946 = vld [vmem:[#allocation2 + $0x60] sm:$0xff]
      %v947 = vld [vmem:[#allocation2 + $0x68] sm:$0xff]
      %v948 = vld [vmem:[#allocation2 + $0x70] sm:$0xff]
      %v949 = vld [vmem:[#allocation2 + $0x78] sm:$0xff]
      %v950 = vld [vmem:[#allocation2 + $0x80] sm:$0xff]
      %v951 = vld [vmem:[#allocation2 + $0x88] sm:$0xff]
      %v952 = vld [vmem:[%s6] sm:$0xff]
      %v953 = vld [vmem:[%s7] sm:$0xff]
      %955 = vset.pattern.permute.xlu0 0
      %956 = vperm.xlu0 %955, %v953
      %v957 = vpop.permute.xlu0 %956
      %vm959 = vcmask 588800
      %v961 = vsel %vm959, %v952, 0
      %963 = vmatprep.subr.mxu0 %v935
      %964 = vmatpush1.msra.mxu0 %v934
      %965 = vmatprep.subr.mxu0 %v937
      %966 = vmatpush1.msra.mxu0 %v936
      %967 = vmatprep.subr.mxu0 %v939
      %968 = vmatpush1.msra.mxu0 %v938
      %969 = vmatprep.subr.mxu0 %v941
      %970 = vmatpush1.msra.mxu0 %v940
      %971 = vmatprep.subr.mxu0 %v943
      %972 = vmatpush1.msra.mxu0 %v942
      %973 = vmatprep.subr.mxu0 %v945
      %974 = vmatpush1.msra.mxu0 %v944
      %975 = vmatprep.subr.mxu0 %v947
      %976 = vmatpush1.msra.mxu0 %v946
      %977 = vmatprep.subr.mxu0 %v949
      %978 = vmatpush1.msra.mxu0 %v948
      %979 = vmatprep.subr.mxu0 %v951
      %980 = vmatpush1.msra.mxu0 %v950
      %981 = vmatprep.subr.mxu0 0.0
      %982 = vmatpush1.msra.mxu0 0.0
      %983 = vmatprep.subr.mxu0 0.0
      %984 = vmatpush1.msra.mxu0 0.0
      %985 = vmatprep.subr.mxu0 0.0
      %986 = vmatpush1.msra.mxu0 0.0
      %987 = vmatprep.subr.mxu0 0.0
      %988 = vmatpush1.msra.mxu0 0.0
      %989 = vmatprep.subr.mxu0 0.0
      %990 = vmatpush1.msra.mxu0 0.0
      %991 = vmatprep.subr.mxu0 0.0
      %992 = vmatpush1.msra.mxu0 0.0
      %993 = vmatprep.subr.mxu0 0.0
      %994 = vmatpush1.msra.mxu0 0.0
      %995 = vmatprep.subr.mxu0 0.0
      %996 = vmatpush1.msra.mxu0 0.0
      %997 = vmatprep.subr.mxu0 0.0
      %998 = vmatpush1.msra.mxu0 0.0
      %999 = vmatprep.subr.mxu0 0.0
      %1000 = vmatpush1.msra.mxu0 0.0
      %1001 = vmatprep.subr.mxu0 0.0
      %1002 = vmatpush1.msra.mxu0 0.0
      %1003 = vmatprep.subr.mxu0 0.0
      %1004 = vmatpush1.msra.mxu0 0.0
      %1005 = vmatprep.subr.mxu0 0.0
      %1006 = vmatpush1.msra.mxu0 0.0
      %1007 = vmatprep.subr.mxu0 0.0
      %1008 = vmatpush1.msra.mxu0 0.0
      %1009 = vmatprep.subr.mxu0 0.0
      %1010 = vmatpush1.msra.mxu0 0.0
      %1011 = vmatprep.subr.mxu0 0.0
      %1012 = vmatpush1.msra.mxu0 0.0
      %1013 = vmatprep.subr.mxu0 0.0
      %1014 = vmatpush1.msra.mxu0 0.0
      %1015 = vmatprep.subr.mxu0 0.0
      %1016 = vmatpush1.msra.mxu0 0.0
      %1017 = vmatprep.subr.mxu0 0.0
      %1018 = vmatpush1.msra.mxu0 0.0
      %1019 = vmatprep.subr.mxu0 0.0
      %1020 = vmatpush1.msra.mxu0 0.0
      %1021 = vmatprep.subr.mxu0 0.0
      %1022 = vmatpush1.msra.mxu0 0.0
      %1023 = vmatprep.subr.mxu0 0.0
      %1024 = vmatpush1.msra.mxu0 0.0
      %1025 = vmatprep.subr.mxu0 0.0
      %1026 = vmatpush1.msra.mxu0 0.0
      %1027 = vmatprep.mubr.f32.mxu0 0.0
      %1028 = vmatmul.mubr.f32.gmra.mrb[0].mxu0 %v961
      %v1029 = vpop.f32.mrb[0].mxu0
      %v1030 = vadd.f32 %v957, %v1029
      %v1031 = vpop.f32.mrb[0].mxu0
      %v1032 = vadd.f32 %v957, %v1031
      %1033 = vdwg.mxu0
      %v1034 = vmax.f32 %v1030, 0.0
      %v1035 = vmax.f32 %v1032, 0.0
      %1036 = vrot.lane.b32.xlu0 %v1034, 17
      %v1037 = vpop.permute.xlu0 %1036
      %1038 = vrot.lane.b32.xlu0 %v1035, 17
      %v1039 = vpop.permute.xlu0 %1038
      %v1040 = vsel %vm503, %v1037, %v1039
      %v1041 = vsel %vm503, %v1039, %v1037
      %v1042 = vmul.f32 %v1041, %v511
      %v1043 = vmul.f32 %v1040, %v515
      %1044 = vst [vmem:[#allocation2] sm:$0xff] %v1042
      %1045 = vst [vmem:[#allocation2 + $0x8] sm:$0xff] %v1043
      %1046 = vrot.lane.b32.xlu0 %v1034, 16
      %v1047 = vpop.permute.xlu0 %1046
      %1048 = vrot.lane.b32.xlu0 %v1035, 16
      %v1049 = vpop.permute.xlu0 %1048
      %v1050 = vsel %vm532, %v1047, %v1049
      %v1051 = vsel %vm532, %v1049, %v1047
      %v1052 = vmul.f32 %v1051, %v540
      %v1053 = vmul.f32 %v1050, %v544
      %1054 = vst [vmem:[#allocation2 + $0x10] sm:$0xff] %v1052
      %1055 = vst [vmem:[#allocation2 + $0x18] sm:$0xff] %v1053
      %1056 = vrot.lane.b32.xlu0 %v1034, 15
      %v1057 = vpop.permute.xlu0 %1056
      %1058 = vrot.lane.b32.xlu0 %v1035, 15
      %v1059 = vpop.permute.xlu0 %1058
      %v1060 = vsel %vm561, %v1057, %v1059
      %v1061 = vsel %vm561, %v1059, %v1057
      %v1062 = vmul.f32 %v1061, %v569
      %v1063 = vmul.f32 %v1060, %v573
      %1064 = vst [vmem:[#allocation2 + $0x20] sm:$0xff] %v1062
      %1065 = vst [vmem:[#allocation2 + $0x28] sm:$0xff] %v1063
      %1066 = vrot.lane.b32.xlu0 %v1034, 1
      %v1067 = vpop.permute.xlu0 %1066
      %1068 = vrot.lane.b32.xlu0 %v1035, 1
      %v1069 = vpop.permute.xlu0 %1068
      %v1070 = vsel %vm590, %v1067, %v1069
      %v1071 = vsel %vm590, %v1069, %v1067
      %v1072 = vmul.f32 %v1071, %v598
      %v1073 = vmul.f32 %v1070, %v602
      %1074 = vst [vmem:[#allocation2 + $0x30] sm:$0xff] %v1072
      %1075 = vst [vmem:[#allocation2 + $0x38] sm:$0xff] %v1073
      %1076 = vst [vmem:[#allocation2 + $0x40] sm:$0xff] %v1034
      %1077 = vst [vmem:[#allocation2 + $0x48] sm:$0xff] %v1035
      %1078 = vrot.lane.b32.xlu0 %v1034, 127
      %v1079 = vpop.permute.xlu0 %1078
      %1080 = vrot.lane.b32.xlu0 %v1035, 127
      %v1081 = vpop.permute.xlu0 %1080
      %v1082 = vsel %vm623, %v1079, %v1081
      %v1083 = vsel %vm623, %v1081, %v1079
      %v1084 = vmul.f32 %v1082, %v631
      %v1085 = vmul.f32 %v1083, %v635
      %1086 = vst [vmem:[#allocation2 + $0x50] sm:$0xff] %v1084
      %1087 = vst [vmem:[#allocation2 + $0x58] sm:$0xff] %v1085
      %1088 = vrot.lane.b32.xlu0 %v1034, 113
      %v1089 = vpop.permute.xlu0 %1088
      %1090 = vrot.lane.b32.xlu0 %v1035, 113
      %v1091 = vpop.permute.xlu0 %1090
      %v1092 = vsel %vm652, %v1089, %v1091
      %v1093 = vsel %vm652, %v1091, %v1089
      %v1094 = vmul.f32 %v1092, %v660
      %v1095 = vmul.f32 %v1093, %v664
      %1096 = vst [vmem:[#allocation2 + $0x60] sm:$0xff] %v1094
      %1097 = vst [vmem:[#allocation2 + $0x68] sm:$0xff] %v1095
      %1098 = vrot.lane.b32.xlu0 %v1034, 112
      %v1099 = vpop.permute.xlu0 %1098
      %1100 = vrot.lane.b32.xlu0 %v1035, 112
      %v1101 = vpop.permute.xlu0 %1100
      %v1102 = vsel %vm681, %v1099, %v1101
      %v1103 = vsel %vm681, %v1101, %v1099
      %v1104 = vmul.f32 %v1102, %v689
      %v1105 = vmul.f32 %v1103, %v693
      %1106 = vst [vmem:[#allocation2 + $0x70] sm:$0xff] %v1104
      %1107 = vst [vmem:[#allocation2 + $0x78] sm:$0xff] %v1105
      %1108 = vrot.lane.b32.xlu0 %v1034, 111
      %v1109 = vpop.permute.xlu0 %1108
      %1110 = vrot.lane.b32.xlu0 %v1035, 111
      %v1111 = vpop.permute.xlu0 %1110
      %v1112 = vsel %vm710, %v1109, %v1111
      %v1113 = vsel %vm710, %v1111, %v1109
      %v1114 = vmul.f32 %v1112, %v718
      %v1115 = vmul.f32 %v1113, %v722
      %1116 = vst [vmem:[#allocation2 + $0x80] sm:$0xff] %v1114
      %1117 = vst [vmem:[#allocation2 + $0x88] sm:$0xff] %v1115
      %v1118 = vld [vmem:[#allocation2] sm:$0xff]
      %v1119 = vld [vmem:[#allocation2 + $0x8] sm:$0xff]
      %v1120 = vld [vmem:[#allocation2 + $0x10] sm:$0xff]
      %v1121 = vld [vmem:[#allocation2 + $0x18] sm:$0xff]
      %v1122 = vld [vmem:[#allocation2 + $0x20] sm:$0xff]
      %v1123 = vld [vmem:[#allocation2 + $0x28] sm:$0xff]
      %v1124 = vld [vmem:[#allocation2 + $0x30] sm:$0xff]
      %v1125 = vld [vmem:[#allocation2 + $0x38] sm:$0xff]
      %v1126 = vld [vmem:[#allocation2 + $0x40] sm:$0xff]
      %v1127 = vld [vmem:[#allocation2 + $0x48] sm:$0xff]
      %v1128 = vld [vmem:[#allocation2 + $0x50] sm:$0xff]
      %v1129 = vld [vmem:[#allocation2 + $0x58] sm:$0xff]
      %v1130 = vld [vmem:[#allocation2 + $0x60] sm:$0xff]
      %v1131 = vld [vmem:[#allocation2 + $0x68] sm:$0xff]
      %v1132 = vld [vmem:[#allocation2 + $0x70] sm:$0xff]
      %v1133 = vld [vmem:[#allocation2 + $0x78] sm:$0xff]
      %v1134 = vld [vmem:[#allocation2 + $0x80] sm:$0xff]
      %v1135 = vld [vmem:[#allocation2 + $0x88] sm:$0xff]
      %v1136 = vld [vmem:[%s8] sm:$0xff]
      %v1137 = vld [vmem:[%s9] sm:$0xff]
      %1139 = vset.pattern.permute.xlu0 0
      %1140 = vperm.xlu0 %1139, %v1137
      %v1141 = vpop.permute.xlu0 %1140
      %v1144 = vsel %vm959, %v1136, 0
      %1146 = vmatprep.subr.mxu0 %v1119
      %1147 = vmatpush1.msra.mxu0 %v1118
      %1148 = vmatprep.subr.mxu0 %v1121
      %1149 = vmatpush1.msra.mxu0 %v1120
      %1150 = vmatprep.subr.mxu0 %v1123
      %1151 = vmatpush1.msra.mxu0 %v1122
      %1152 = vmatprep.subr.mxu0 %v1125
      %1153 = vmatpush1.msra.mxu0 %v1124
      %1154 = vmatprep.subr.mxu0 %v1127
      %1155 = vmatpush1.msra.mxu0 %v1126
      %1156 = vmatprep.subr.mxu0 %v1129
      %1157 = vmatpush1.msra.mxu0 %v1128
      %1158 = vmatprep.subr.mxu0 %v1131
      %1159 = vmatpush1.msra.mxu0 %v1130
      %1160 = vmatprep.subr.mxu0 %v1133
      %1161 = vmatpush1.msra.mxu0 %v1132
      %1162 = vmatprep.subr.mxu0 %v1135
      %1163 = vmatpush1.msra.mxu0 %v1134
      %1164 = vmatprep.subr.mxu0 0.0
      %1165 = vmatpush1.msra.mxu0 0.0
      %1166 = vmatprep.subr.mxu0 0.0
      %1167 = vmatpush1.msra.mxu0 0.0
      %1168 = vmatprep.subr.mxu0 0.0
      %1169 = vmatpush1.msra.mxu0 0.0
      %1170 = vmatprep.subr.mxu0 0.0
      %1171 = vmatpush1.msra.mxu0 0.0
      %1172 = vmatprep.subr.mxu0 0.0
      %1173 = vmatpush1.msra.mxu0 0.0
      %1174 = vmatprep.subr.mxu0 0.0
      %1175 = vmatpush1.msra.mxu0 0.0
      %1176 = vmatprep.subr.mxu0 0.0
      %1177 = vmatpush1.msra.mxu0 0.0
      %1178 = vmatprep.subr.mxu0 0.0
      %1179 = vmatpush1.msra.mxu0 0.0
      %1180 = vmatprep.subr.mxu0 0.0
      %1181 = vmatpush1.msra.mxu0 0.0
      %1182 = vmatprep.subr.mxu0 0.0
      %1183 = vmatpush1.msra.mxu0 0.0
      %1184 = vmatprep.subr.mxu0 0.0
      %1185 = vmatpush1.msra.mxu0 0.0
      %1186 = vmatprep.subr.mxu0 0.0
      %1187 = vmatpush1.msra.mxu0 0.0
      %1188 = vmatprep.subr.mxu0 0.0
      %1189 = vmatpush1.msra.mxu0 0.0
      %1190 = vmatprep.subr.mxu0 0.0
      %1191 = vmatpush1.msra.mxu0 0.0
      %1192 = vmatprep.subr.mxu0 0.0
      %1193 = vmatpush1.msra.mxu0 0.0
      %1194 = vmatprep.subr.mxu0 0.0
      %1195 = vmatpush1.msra.mxu0 0.0
      %1196 = vmatprep.subr.mxu0 0.0
      %1197 = vmatpush1.msra.mxu0 0.0
      %1198 = vmatprep.subr.mxu0 0.0
      %1199 = vmatpush1.msra.mxu0 0.0
      %1200 = vmatprep.subr.mxu0 0.0
      %1201 = vmatpush1.msra.mxu0 0.0
      %1202 = vmatprep.subr.mxu0 0.0
      %1203 = vmatpush1.msra.mxu0 0.0
      %1204 = vmatprep.subr.mxu0 0.0
      %1205 = vmatpush1.msra.mxu0 0.0
      %1206 = vmatprep.subr.mxu0 0.0
      %1207 = vmatpush1.msra.mxu0 0.0
      %1208 = vmatprep.subr.mxu0 0.0
      %1209 = vmatpush1.msra.mxu0 0.0
      %1210 = vmatprep.mubr.f32.mxu0 0.0
      %1211 = vmatmul.mubr.f32.gmra.mrb[0].mxu0 %v1144
      %v1212 = vpop.f32.mrb[0].mxu0
      %v1213 = vadd.f32 %v1141, %v1212
      %v1214 = vpop.f32.mrb[0].mxu0
      %v1215 = vadd.f32 %v1141, %v1214
      %1216 = vdwg.mxu0
      %v1217 = vadd.f32 %v846, %v1213
      %v1218 = vadd.f32 %v848, %v1215
      %v1219 = vld [vmem:[%s479] sm:$0xff]
      %v1220 = vld [vmem:[%s3] sm:$0xff]
      %v1221 = vld [vmem:[%s3 + $0x8] sm:$0xff]
      %v1222 = vld [vmem:[%s3 + $0x10] sm:$0xff]
      %v1223 = vld [vmem:[%s3 + $0x18] sm:$0xff]
      %v1224 = vld [vmem:[%s3 + $0x20] sm:$0xff]
      %v1225 = vld [vmem:[%s3 + $0x28] sm:$0xff]
      %v1226 = vld [vmem:[%s3 + $0x30] sm:$0xff]
      %v1227 = vld [vmem:[%s3 + $0x38] sm:$0xff]
      %v1228 = vld [vmem:[%s3 + $0x40] sm:$0xff]
      %v1229 = vld [vmem:[%s3 + $0x48] sm:$0xff]
      %v1230 = vld [vmem:[%s3 + $0x50] sm:$0xff]
      %v1231 = vld [vmem:[%s3 + $0x58] sm:$0xff]
      %v1232 = vld [vmem:[%s3 + $0x60] sm:$0xff]
      %v1233 = vld [vmem:[%s3 + $0x68] sm:$0xff]
      %v1234 = vld [vmem:[%s3 + $0x70] sm:$0xff]
      %v1235 = vld [vmem:[%s3 + $0x78] sm:$0xff]
      %vm1236 = vcmask 523264
      %v1238 = vsel %vm1236, %v1219, 0
      %1240 = vmatprep.subr.mxu0 %v1221
      %1241 = vmatpush1.msra.mxu0 %v1220
      %1242 = vmatprep.subr.mxu0 %v1223
      %1243 = vmatpush1.msra.mxu0 %v1222
      %1244 = vmatprep.subr.mxu0 %v1225
      %1245 = vmatpush1.msra.mxu0 %v1224
      %1246 = vmatprep.subr.mxu0 %v1227
      %1247 = vmatpush1.msra.mxu0 %v1226
      %1248 = vmatprep.subr.mxu0 %v1229
      %1249 = vmatpush1.msra.mxu0 %v1228
      %1250 = vmatprep.subr.mxu0 %v1231
      %1251 = vmatpush1.msra.mxu0 %v1230
      %1252 = vmatprep.subr.mxu0 %v1233
      %1253 = vmatpush1.msra.mxu0 %v1232
      %1254 = vmatprep.subr.mxu0 %v1235
      %1255 = vmatpush1.msra.mxu0 %v1234
      %1256 = vmatprep.subr.mxu0 0.0
      %1257 = vmatpush1.msra.mxu0 0.0
      %1258 = vmatprep.subr.mxu0 0.0
      %1259 = vmatpush1.msra.mxu0 0.0
      %1260 = vmatprep.subr.mxu0 0.0
      %1261 = vmatpush1.msra.mxu0 0.0
      %1262 = vmatprep.subr.mxu0 0.0
      %1263 = vmatpush1.msra.mxu0 0.0
      %1264 = vmatprep.subr.mxu0 0.0
      %1265 = vmatpush1.msra.mxu0 0.0
      %1266 = vmatprep.subr.mxu0 0.0
      %1267 = vmatpush1.msra.mxu0 0.0
      %1268 = vmatprep.subr.mxu0 0.0
      %1269 = vmatpush1.msra.mxu0 0.0
      %1270 = vmatprep.subr.mxu0 0.0
      %1271 = vmatpush1.msra.mxu0 0.0
      %1272 = vmatprep.subr.mxu0 0.0
      %1273 = vmatpush1.msra.mxu0 0.0
      %1274 = vmatprep.subr.mxu0 0.0
      %1275 = vmatpush1.msra.mxu0 0.0
      %1276 = vmatprep.subr.mxu0 0.0
      %1277 = vmatpush1.msra.mxu0 0.0
      %1278 = vmatprep.subr.mxu0 0.0
      %1279 = vmatpush1.msra.mxu0 0.0
      %1280 = vmatprep.subr.mxu0 0.0
      %1281 = vmatpush1.msra.mxu0 0.0
      %1282 = vmatprep.subr.mxu0 0.0
      %1283 = vmatpush1.msra.mxu0 0.0
      %1284 = vmatprep.subr.mxu0 0.0
      %1285 = vmatpush1.msra.mxu0 0.0
      %1286 = vmatprep.subr.mxu0 0.0
      %1287 = vmatpush1.msra.mxu0 0.0
      %1288 = vmatprep.subr.mxu0 0.0
      %1289 = vmatpush1.msra.mxu0 0.0
      %1290 = vmatprep.subr.mxu0 0.0
      %1291 = vmatpush1.msra.mxu0 0.0
      %1292 = vmatprep.subr.mxu0 0.0
      %1293 = vmatpush1.msra.mxu0 0.0
      %1294 = vmatprep.subr.mxu0 0.0
      %1295 = vmatpush1.msra.mxu0 0.0
      %1296 = vmatprep.subr.mxu0 0.0
      %1297 = vmatpush1.msra.mxu0 0.0
      %1298 = vmatprep.subr.mxu0 0.0
      %1299 = vmatpush1.msra.mxu0 0.0
      %1300 = vmatprep.subr.mxu0 0.0
      %1301 = vmatpush1.msra.mxu0 0.0
      %1302 = vmatprep.subr.mxu0 0.0
      %1303 = vmatpush1.msra.mxu0 0.0
      %1304 = vmatprep.mubr.f32.mxu0 0.0
      %1305 = vmatmul.mubr.f32.gmra.mrb[0].mxu0 %v1238
      %v1306 = vpop.f32.mrb[0].mxu0
      %v1307 = vadd.f32 0.0, %v1306
      %v1308 = vpop.f32.mrb[0].mxu0
      %v1309 = vadd.f32 0.0, %v1308
      %1310 = vdwg.mxu0
      %v1311 = vadd.f32 %v1217, %v1307
      %v1312 = vadd.f32 %v1218, %v1309
      %v1313 = vmax.f32 %v1311, 0.0
      %v1314 = vmax.f32 %v1312, 0.0
      %1315 = vrot.lane.b32.xlu0 %v1313, 17
      %v1316 = vpop.permute.xlu0 %1315
      %1317 = vrot.lane.b32.xlu0 %v1314, 17
      %v1318 = vpop.permute.xlu0 %1317
      %v1319 = vsel %vm503, %v1316, %v1318
      %v1320 = vsel %vm503, %v1318, %v1316
      %v1321 = vmul.f32 %v1320, %v511
      %v1322 = vmul.f32 %v1319, %v515
      %1323 = vst [vmem:[#allocation2] sm:$0xff] %v1321
      %1324 = vst [vmem:[#allocation2 + $0x8] sm:$0xff] %v1322
      %1325 = vrot.lane.b32.xlu0 %v1313, 16
      %v1326 = vpop.permute.xlu0 %1325
      %1327 = vrot.lane.b32.xlu0 %v1314, 16
      %v1328 = vpop.permute.xlu0 %1327
      %v1329 = vsel %vm532, %v1326, %v1328
      %v1330 = vsel %vm532, %v1328, %v1326
      %v1331 = vmul.f32 %v1330, %v540
      %v1332 = vmul.f32 %v1329, %v544
      %1333 = vst [vmem:[#allocation2 + $0x10] sm:$0xff] %v1331
      %1334 = vst [vmem:[#allocation2 + $0x18] sm:$0xff] %v1332
      %1335 = vrot.lane.b32.xlu0 %v1313, 15
      %v1336 = vpop.permute.xlu0 %1335
      %1337 = vrot.lane.b32.xlu0 %v1314, 15
      %v1338 = vpop.permute.xlu0 %1337
      %v1339 = vsel %vm561, %v1336, %v1338
      %v1340 = vsel %vm561, %v1338, %v1336
      %v1341 = vmul.f32 %v1340, %v569
      %v1342 = vmul.f32 %v1339, %v573
      %1343 = vst [vmem:[#allocation2 + $0x20] sm:$0xff] %v1341
      %1344 = vst [vmem:[#allocation2 + $0x28] sm:$0xff] %v1342
      %1345 = vrot.lane.b32.xlu0 %v1313, 1
      %v1346 = vpop.permute.xlu0 %1345
      %1347 = vrot.lane.b32.xlu0 %v1314, 1
      %v1348 = vpop.permute.xlu0 %1347
      %v1349 = vsel %vm590, %v1346, %v1348
      %v1350 = vsel %vm590, %v1348, %v1346
      %v1351 = vmul.f32 %v1350, %v598
      %v1352 = vmul.f32 %v1349, %v602
      %1353 = vst [vmem:[#allocation2 + $0x30] sm:$0xff] %v1351
      %1354 = vst [vmem:[#allocation2 + $0x38] sm:$0xff] %v1352
      %1355 = vst [vmem:[#allocation2 + $0x40] sm:$0xff] %v1313
      %1356 = vst [vmem:[#allocation2 + $0x48] sm:$0xff] %v1314
      %1357 = vrot.lane.b32.xlu0 %v1313, 127
      %v1358 = vpop.permute.xlu0 %1357
      %1359 = vrot.lane.b32.xlu0 %v1314, 127
      %v1360 = vpop.permute.xlu0 %1359
      %v1361 = vsel %vm623, %v1358, %v1360
      %v1362 = vsel %vm623, %v1360, %v1358
      %v1363 = vmul.f32 %v1361, %v631
      %v1364 = vmul.f32 %v1362, %v635
      %1365 = vst [vmem:[#allocation2 + $0x50] sm:$0xff] %v1363
      %1366 = vst [vmem:[#allocation2 + $0x58] sm:$0xff] %v1364
      %1367 = vrot.lane.b32.xlu0 %v1313, 113
      %v1368 = vpop.permute.xlu0 %1367
      %1369 = vrot.lane.b32.xlu0 %v1314, 113
      %v1370 = vpop.permute.xlu0 %1369
      %v1371 = vsel %vm652, %v1368, %v1370
      %v1372 = vsel %vm652, %v1370, %v1368
      %v1373 = vmul.f32 %v1371, %v660
      %v1374 = vmul.f32 %v1372, %v664
      %1375 = vst [vmem:[#allocation2 + $0x60] sm:$0xff] %v1373
      %1376 = vst [vmem:[#allocation2 + $0x68] sm:$0xff] %v1374
      %1377 = vrot.lane.b32.xlu0 %v1313, 112
      %v1378 = vpop.permute.xlu0 %1377
      %1379 = vrot.lane.b32.xlu0 %v1314, 112
      %v1380 = vpop.permute.xlu0 %1379
      %v1381 = vsel %vm681, %v1378, %v1380
      %v1382 = vsel %vm681, %v1380, %v1378
      %v1383 = vmul.f32 %v1381, %v689
      %v1384 = vmul.f32 %v1382, %v693
      %1385 = vst [vmem:[#allocation2 + $0x70] sm:$0xff] %v1383
      %1386 = vst [vmem:[#allocation2 + $0x78] sm:$0xff] %v1384
      %1387 = vrot.lane.b32.xlu0 %v1313, 111
      %v1388 = vpop.permute.xlu0 %1387
      %1389 = vrot.lane.b32.xlu0 %v1314, 111
      %v1390 = vpop.permute.xlu0 %1389
      %v1391 = vsel %vm710, %v1388, %v1390
      %v1392 = vsel %vm710, %v1390, %v1388
      %v1393 = vmul.f32 %v1391, %v718
      %v1394 = vmul.f32 %v1392, %v722
      %1395 = vst [vmem:[#allocation2 + $0x80] sm:$0xff] %v1393
      %1396 = vst [vmem:[#allocation2 + $0x88] sm:$0xff] %v1394
      %v1397 = vld [vmem:[#allocation2] sm:$0xff]
      %v1398 = vld [vmem:[#allocation2 + $0x8] sm:$0xff]
      %v1399 = vld [vmem:[#allocation2 + $0x10] sm:$0xff]
      %v1400 = vld [vmem:[#allocation2 + $0x18] sm:$0xff]
      %v1401 = vld [vmem:[#allocation2 + $0x20] sm:$0xff]
      %v1402 = vld [vmem:[#allocation2 + $0x28] sm:$0xff]
      %v1403 = vld [vmem:[#allocation2 + $0x30] sm:$0xff]
      %v1404 = vld [vmem:[#allocation2 + $0x38] sm:$0xff]
      %v1405 = vld [vmem:[#allocation2 + $0x40] sm:$0xff]
      %v1406 = vld [vmem:[#allocation2 + $0x48] sm:$0xff]
      %v1407 = vld [vmem:[#allocation2 + $0x50] sm:$0xff]
      %v1408 = vld [vmem:[#allocation2 + $0x58] sm:$0xff]
      %v1409 = vld [vmem:[#allocation2 + $0x60] sm:$0xff]
      %v1410 = vld [vmem:[#allocation2 + $0x68] sm:$0xff]
      %v1411 = vld [vmem:[#allocation2 + $0x70] sm:$0xff]
      %v1412 = vld [vmem:[#allocation2 + $0x78] sm:$0xff]
      %v1413 = vld [vmem:[#allocation2 + $0x80] sm:$0xff]
      %v1414 = vld [vmem:[#allocation2 + $0x88] sm:$0xff]
      %v1415 = vld [vmem:[%s10] sm:$0xff]
      %v1416 = vld [vmem:[%s11] sm:$0xff]
      %1418 = vset.pattern.permute.xlu0 0
      %1419 = vperm.xlu0 %1418, %v1416
      %v1420 = vpop.permute.xlu0 %1419
      %v1423 = vsel %vm959, %v1415, 0
      %1425 = vmatprep.subr.mxu0 %v1398
      %1426 = vmatpush1.msra.mxu0 %v1397
      %1427 = vmatprep.subr.mxu0 %v1400
      %1428 = vmatpush1.msra.mxu0 %v1399
      %1429 = vmatprep.subr.mxu0 %v1402
      %1430 = vmatpush1.msra.mxu0 %v1401
      %1431 = vmatprep.subr.mxu0 %v1404
      %1432 = vmatpush1.msra.mxu0 %v1403
      %1433 = vmatprep.subr.mxu0 %v1406
      %1434 = vmatpush1.msra.mxu0 %v1405
      %1435 = vmatprep.subr.mxu0 %v1408
      %1436 = vmatpush1.msra.mxu0 %v1407
      %1437 = vmatprep.subr.mxu0 %v1410
      %1438 = vmatpush1.msra.mxu0 %v1409
      %1439 = vmatprep.subr.mxu0 %v1412
      %1440 = vmatpush1.msra.mxu0 %v1411
      %1441 = vmatprep.subr.mxu0 %v1414
      %1442 = vmatpush1.msra.mxu0 %v1413
      %1443 = vmatprep.subr.mxu0 0.0
      %1444 = vmatpush1.msra.mxu0 0.0
      %1445 = vmatprep.subr.mxu0 0.0
      %1446 = vmatpush1.msra.mxu0 0.0
      %1447 = vmatprep.subr.mxu0 0.0
      %1448 = vmatpush1.msra.mxu0 0.0
      %1449 = vmatprep.subr.mxu0 0.0
      %1450 = vmatpush1.msra.mxu0 0.0
      %1451 = vmatprep.subr.mxu0 0.0
      %1452 = vmatpush1.msra.mxu0 0.0
      %1453 = vmatprep.subr.mxu0 0.0
      %1454 = vmatpush1.msra.mxu0 0.0
      %1455 = vmatprep.subr.mxu0 0.0
      %1456 = vmatpush1.msra.mxu0 0.0
      %1457 = vmatprep.subr.mxu0 0.0
      %1458 = vmatpush1.msra.mxu0 0.0
      %1459 = vmatprep.subr.mxu0 0.0
      %1460 = vmatpush1.msra.mxu0 0.0
      %1461 = vmatprep.subr.mxu0 0.0
      %1462 = vmatpush1.msra.mxu0 0.0
      %1463 = vmatprep.subr.mxu0 0.0
      %1464 = vmatpush1.msra.mxu0 0.0
      %1465 = vmatprep.subr.mxu0 0.0
      %1466 = vmatpush1.msra.mxu0 0.0
      %1467 = vmatprep.subr.mxu0 0.0
      %1468 = vmatpush1.msra.mxu0 0.0
      %1469 = vmatprep.subr.mxu0 0.0
      %1470 = vmatpush1.msra.mxu0 0.0
      %1471 = vmatprep.subr.mxu0 0.0
      %1472 = vmatpush1.msra.mxu0 0.0
      %1473 = vmatprep.subr.mxu0 0.0
      %1474 = vmatpush1.msra.mxu0 0.0
      %1475 = vmatprep.subr.mxu0 0.0
      %1476 = vmatpush1.msra.mxu0 0.0
      %1477 = vmatprep.subr.mxu0 0.0
      %1478 = vmatpush1.msra.mxu0 0.0
      %1479 = vmatprep.subr.mxu0 0.0
      %1480 = vmatpush1.msra.mxu0 0.0
      %1481 = vmatprep.subr.mxu0 0.0
      %1482 = vmatpush1.msra.mxu0 0.0
      %1483 = vmatprep.subr.mxu0 0.0
      %1484 = vmatpush1.msra.mxu0 0.0
      %1485 = vmatprep.subr.mxu0 0.0
      %1486 = vmatpush1.msra.mxu0 0.0
      %1487 = vmatprep.subr.mxu0 0.0
      %1488 = vmatpush1.msra.mxu0 0.0
      %1489 = vmatprep.mubr.f32.mxu0 0.0
      %1490 = vmatmul.mubr.f32.gmra.mrb[0].mxu0 %v1423
      %v1491 = vpop.f32.mrb[0].mxu0
      %v1492 = vadd.f32 %v1420, %v1491
      %v1493 = vpop.f32.mrb[0].mxu0
      %v1494 = vadd.f32 %v1420, %v1493
      %1495 = vdwg.mxu0
      %v1496 = vmax.f32 %v1492, 0.0
      %v1497 = vmax.f32 %v1494, 0.0
      %1498 = vrot.lane.b32.xlu0 %v1496, 17
      %v1499 = vpop.permute.xlu0 %1498
      %1500 = vrot.lane.b32.xlu0 %v1497, 17
      %v1501 = vpop.permute.xlu0 %1500
      %v1502 = vsel %vm503, %v1499, %v1501
      %v1503 = vsel %vm503, %v1501, %v1499
      %v1504 = vmul.f32 %v1503, %v511
      %v1505 = vmul.f32 %v1502, %v515
      %1506 = vst [vmem:[#allocation2] sm:$0xff] %v1504
      %1507 = vst [vmem:[#allocation2 + $0x8] sm:$0xff] %v1505
      %1508 = vrot.lane.b32.xlu0 %v1496, 16
      %v1509 = vpop.permute.xlu0 %1508
      %1510 = vrot.lane.b32.xlu0 %v1497, 16
      %v1511 = vpop.permute.xlu0 %1510
      %v1512 = vsel %vm532, %v1509, %v1511
      %v1513 = vsel %vm532, %v1511, %v1509
      %v1514 = vmul.f32 %v1513, %v540
      %v1515 = vmul.f32 %v1512, %v544
      %1516 = vst [vmem:[#allocation2 + $0x10] sm:$0xff] %v1514
      %1517 = vst [vmem:[#allocation2 + $0x18] sm:$0xff] %v1515
      %1518 = vrot.lane.b32.xlu0 %v1496, 15
      %v1519 = vpop.permute.xlu0 %1518
      %1520 = vrot.lane.b32.xlu0 %v1497, 15
      %v1521 = vpop.permute.xlu0 %1520
      %v1522 = vsel %vm561, %v1519, %v1521
      %v1523 = vsel %vm561, %v1521, %v1519
      %v1524 = vmul.f32 %v1523, %v569
      %v1525 = vmul.f32 %v1522, %v573
      %1526 = vst [vmem:[#allocation2 + $0x20] sm:$0xff] %v1524
      %1527 = vst [vmem:[#allocation2 + $0x28] sm:$0xff] %v1525
      %1528 = vrot.lane.b32.xlu0 %v1496, 1
      %v1529 = vpop.permute.xlu0 %1528
      %1530 = vrot.lane.b32.xlu0 %v1497, 1
      %v1531 = vpop.permute.xlu0 %1530
      %v1532 = vsel %vm590, %v1529, %v1531
      %v1533 = vsel %vm590, %v1531, %v1529
      %v1534 = vmul.f32 %v1533, %v598
      %v1535 = vmul.f32 %v1532, %v602
      %1536 = vst [vmem:[#allocation2 + $0x30] sm:$0xff] %v1534
      %1537 = vst [vmem:[#allocation2 + $0x38] sm:$0xff] %v1535
      %1538 = vst [vmem:[#allocation2 + $0x40] sm:$0xff] %v1496
      %1539 = vst [vmem:[#allocation2 + $0x48] sm:$0xff] %v1497
      %1540 = vrot.lane.b32.xlu0 %v1496, 127
      %v1541 = vpop.permute.xlu0 %1540
      %1542 = vrot.lane.b32.xlu0 %v1497, 127
      %v1543 = vpop.permute.xlu0 %1542
      %v1544 = vsel %vm623, %v1541, %v1543
      %v1545 = vsel %vm623, %v1543, %v1541
      %v1546 = vmul.f32 %v1544, %v631
      %v1547 = vmul.f32 %v1545, %v635
      %1548 = vst [vmem:[#allocation2 + $0x50] sm:$0xff] %v1546
      %1549 = vst [vmem:[#allocation2 + $0x58] sm:$0xff] %v1547
      %1550 = vrot.lane.b32.xlu0 %v1496, 113
      %v1551 = vpop.permute.xlu0 %1550
      %1552 = vrot.lane.b32.xlu0 %v1497, 113
      %v1553 = vpop.permute.xlu0 %1552
      %v1554 = vsel %vm652, %v1551, %v1553
      %v1555 = vsel %vm652, %v1553, %v1551
      %v1556 = vmul.f32 %v1554, %v660
      %v1557 = vmul.f32 %v1555, %v664
      %1558 = vst [vmem:[#allocation2 + $0x60] sm:$0xff] %v1556
      %1559 = vst [vmem:[#allocation2 + $0x68] sm:$0xff] %v1557
      %1560 = vrot.lane.b32.xlu0 %v1496, 112
      %v1561 = vpop.permute.xlu0 %1560
      %1562 = vrot.lane.b32.xlu0 %v1497, 112
      %v1563 = vpop.permute.xlu0 %1562
      %v1564 = vsel %vm681, %v1561, %v1563
      %v1565 = vsel %vm681, %v1563, %v1561
      %v1566 = vmul.f32 %v1564, %v689
      %v1567 = vmul.f32 %v1565, %v693
      %1568 = vst [vmem:[#allocation2 + $0x70] sm:$0xff] %v1566
      %1569 = vst [vmem:[#allocation2 + $0x78] sm:$0xff] %v1567
      %1570 = vrot.lane.b32.xlu0 %v1496, 111
      %v1571 = vpop.permute.xlu0 %1570
      %1572 = vrot.lane.b32.xlu0 %v1497, 111
      %v1573 = vpop.permute.xlu0 %1572
      %v1574 = vsel %vm710, %v1571, %v1573
      %v1575 = vsel %vm710, %v1573, %v1571
      %v1576 = vmul.f32 %v1574, %v718
      %v1577 = vmul.f32 %v1575, %v722
      %1578 = vst [vmem:[#allocation2 + $0x80] sm:$0xff] %v1576
      %1579 = vst [vmem:[#allocation2 + $0x88] sm:$0xff] %v1577
      %v1580 = vld [vmem:[#allocation2] sm:$0xff]
      %v1581 = vld [vmem:[#allocation2 + $0x8] sm:$0xff]
      %v1582 = vld [vmem:[#allocation2 + $0x10] sm:$0xff]
      %v1583 = vld [vmem:[#allocation2 + $0x18] sm:$0xff]
      %v1584 = vld [vmem:[#allocation2 + $0x20] sm:$0xff]
      %v1585 = vld [vmem:[#allocation2 + $0x28] sm:$0xff]
      %v1586 = vld [vmem:[#allocation2 + $0x30] sm:$0xff]
      %v1587 = vld [vmem:[#allocation2 + $0x38] sm:$0xff]
      %v1588 = vld [vmem:[#allocation2 + $0x40] sm:$0xff]
      %v1589 = vld [vmem:[#allocation2 + $0x48] sm:$0xff]
      %v1590 = vld [vmem:[#allocation2 + $0x50] sm:$0xff]
      %v1591 = vld [vmem:[#allocation2 + $0x58] sm:$0xff]
      %v1592 = vld [vmem:[#allocation2 + $0x60] sm:$0xff]
      %v1593 = vld [vmem:[#allocation2 + $0x68] sm:$0xff]
      %v1594 = vld [vmem:[#allocation2 + $0x70] sm:$0xff]
      %v1595 = vld [vmem:[#allocation2 + $0x78] sm:$0xff]
      %v1596 = vld [vmem:[#allocation2 + $0x80] sm:$0xff]
      %v1597 = vld [vmem:[#allocation2 + $0x88] sm:$0xff]
      %v1598 = vld [vmem:[%s12] sm:$0xff]
      %v1599 = vld [vmem:[%s13] sm:$0xff]
      %1601 = vset.pattern.permute.xlu0 0
      %1602 = vperm.xlu0 %1601, %v1599
      %v1603 = vpop.permute.xlu0 %1602
      %v1606 = vsel %vm959, %v1598, 0
      %1608 = vmatprep.subr.mxu0 %v1581
      %1609 = vmatpush1.msra.mxu0 %v1580
      %1610 = vmatprep.subr.mxu0 %v1583
      %1611 = vmatpush1.msra.mxu0 %v1582
      %1612 = vmatprep.subr.mxu0 %v1585
      %1613 = vmatpush1.msra.mxu0 %v1584
      %1614 = vmatprep.subr.mxu0 %v1587
      %1615 = vmatpush1.msra.mxu0 %v1586
      %1616 = vmatprep.subr.mxu0 %v1589
      %1617 = vmatpush1.msra.mxu0 %v1588
      %1618 = vmatprep.subr.mxu0 %v1591
      %1619 = vmatpush1.msra.mxu0 %v1590
      %1620 = vmatprep.subr.mxu0 %v1593
      %1621 = vmatpush1.msra.mxu0 %v1592
      %1622 = vmatprep.subr.mxu0 %v1595
      %1623 = vmatpush1.msra.mxu0 %v1594
      %1624 = vmatprep.subr.mxu0 %v1597
      %1625 = vmatpush1.msra.mxu0 %v1596
      %1626 = vmatprep.subr.mxu0 0.0
      %1627 = vmatpush1.msra.mxu0 0.0
      %1628 = vmatprep.subr.mxu0 0.0
      %1629 = vmatpush1.msra.mxu0 0.0
      %1630 = vmatprep.subr.mxu0 0.0
      %1631 = vmatpush1.msra.mxu0 0.0
      %1632 = vmatprep.subr.mxu0 0.0
      %1633 = vmatpush1.msra.mxu0 0.0
      %1634 = vmatprep.subr.mxu0 0.0
      %1635 = vmatpush1.msra.mxu0 0.0
      %1636 = vmatprep.subr.mxu0 0.0
      %1637 = vmatpush1.msra.mxu0 0.0
      %1638 = vmatprep.subr.mxu0 0.0
      %1639 = vmatpush1.msra.mxu0 0.0
      %1640 = vmatprep.subr.mxu0 0.0
      %1641 = vmatpush1.msra.mxu0 0.0
      %1642 = vmatprep.subr.mxu0 0.0
      %1643 = vmatpush1.msra.mxu0 0.0
      %1644 = vmatprep.subr.mxu0 0.0
      %1645 = vmatpush1.msra.mxu0 0.0
      %1646 = vmatprep.subr.mxu0 0.0
      %1647 = vmatpush1.msra.mxu0 0.0
      %1648 = vmatprep.subr.mxu0 0.0
      %1649 = vmatpush1.msra.mxu0 0.0
      %1650 = vmatprep.subr.mxu0 0.0
      %1651 = vmatpush1.msra.mxu0 0.0
      %1652 = vmatprep.subr.mxu0 0.0
      %1653 = vmatpush1.msra.mxu0 0.0
      %1654 = vmatprep.subr.mxu0 0.0
      %1655 = vmatpush1.msra.mxu0 0.0
      %1656 = vmatprep.subr.mxu0 0.0
      %1657 = vmatpush1.msra.mxu0 0.0
      %1658 = vmatprep.subr.mxu0 0.0
      %1659 = vmatpush1.msra.mxu0 0.0
      %1660 = vmatprep.subr.mxu0 0.0
      %1661 = vmatpush1.msra.mxu0 0.0
      %1662 = vmatprep.subr.mxu0 0.0
      %1663 = vmatpush1.msra.mxu0 0.0
      %1664 = vmatprep.subr.mxu0 0.0
      %1665 = vmatpush1.msra.mxu0 0.0
      %1666 = vmatprep.subr.mxu0 0.0
      %1667 = vmatpush1.msra.mxu0 0.0
      %1668 = vmatprep.subr.mxu0 0.0
      %1669 = vmatpush1.msra.mxu0 0.0
      %1670 = vmatprep.subr.mxu0 0.0
      %1671 = vmatpush1.msra.mxu0 0.0
      %1672 = vmatprep.mubr.f32.mxu0 0.0
      %1673 = vmatmul.mubr.f32.gmra.mrb[0].mxu0 %v1606
      %v1674 = vpop.f32.mrb[0].mxu0
      %v1675 = vadd.f32 %v1603, %v1674
      %v1676 = vpop.f32.mrb[0].mxu0
      %v1677 = vadd.f32 %v1603, %v1676
      %1678 = vdwg.mxu0
      %v1679 = vadd.f32 %v1311, %v1675
      %v1680 = vadd.f32 %v1312, %v1677
      %1681 = vst [vmem:[%s484] sm:$0xff] %v1679
      %1682 = vst [vmem:[%s484 + $0x8] sm:$0xff] %v1680
      %p1683 = scmp.lt.s32.totalorder %s25, 1
      %s1684 = scalar_select %p1683, %s25, 1
      %s1685 = smul.addr %s1684, 2
      %s1686 = smul.addr %s1685, 8
      %s1687 = scalar_lea.vmem %s14, %s1686
      // Predicated region
      $region77: #{refine_forward.1} parent=75 // pred_check
        %p1688 = pneg %p347
      $region78: #{refine_forward.1} parent=75 // pred_check_branch
        %1690 = sbr.rel (%p1688) target = $region80
      $region79: #{refine_forward.1} parent=75 // pred_region
        _
      $region80: #{refine_forward.1} parent=75 // pred_fallthru
        _
    $region76: #{refine_forward.1} parent=5 // pred_fallthru
      _
    %p1691 = scmp.le.s32.totalorder 2, %s20
    // Predicated region
    $region81: #{refine_forward.1} parent=5 // pred_check
      %p1692 = pneg %p1691
    $region82: #{refine_forward.1} parent=5 // pred_check_branch
      %1694 = sbr.rel (%p1692) target = $region84
    $region83: #{refine_forward.1} parent=5 // pred_region
      %s1695 = ssub.s32 %s20, 2
      // Predicated region
      $region85: #{refine_forward.1} parent=83 // pred_check
        %p1696 = pneg %p353
      $region86: #{refine_forward.1} parent=83 // pred_check_branch
        %1698 = sbr.rel (%p1696) target = $region88
      $region87: #{refine_forward.1} parent=83 // pred_region
        %p1699 = scmp.lt.s32.totalorder %s26, 1
        %s1700 = scalar_select %p1699, %s26, 1
        %s1701 = smul.addr %s1700, 2
        %s1702 = smul.addr %s1701, 8
        %s1703 = scalar_lea.vmem %s14, %s1702
      $region88: #{refine_forward.1} parent=83 // pred_fallthru
        _
    $region84: #{refine_forward.1} parent=5 // pred_fallthru
      _
  $region6: #{refine_forward.1} parent=0 // loop_footer
    %s24 = sadd.s32 1, %s20
  $region7: #{refine_forward.1} parent=0 // loop_footer_branch
    %19 = sbr.rel target = $region3
  $region8: #{refine_forward.1} parent=0 // loop_exit
    _

</llo_original>
